<compile_context>
chip_gen: v7x
topology: tpu7x:2x2x1
jax: 0.10.0
libtpu: 0.0.40
codegen_flags: <defaults>
</compile_context>

<pallas_src>
import functools

import jax
import jax.numpy as jnp
from jax.experimental import pallas as pl
from jax.experimental.pallas import tpu as pltpu


H1, H2 = 400, 300            # logical hidden sizes (PyTorch module)
H1P, H2P = 512, 384          # lane-padded storage sizes (multiples of 128)
DP = 128                     # padded input feature dim (state+action -> 128)
OPTP = 128                   # padded option dim (lane-dense output)
VAT_NOISE = 0.005


def _round_up(v, m):
    return ((v + m - 1) // m) * m


def _option_encode_kernel(xu_ref, eps_ref, w1_ref, b1_ref, w2_ref, b2_ref,
                          w3_ref, b3_ref, o_ref, *, option_num, vat_noise):
    """One row tile: build clean+noisy activation slab, run the 3-layer MLP
    (layer 1 f32; layers 2/3 bf16-in / f32-acc on the MXU) and a masked,
    lane-dense softmax.  Output block is (2, TILE_B, OPTP)."""
    xu = xu_ref[...]                                        # (TB, DP) f32
    eps = eps_ref[...]                                      # (TB, DP) f32
    xu_noise = xu + vat_noise * eps * jnp.abs(xu)           # VAT noise, f32
    xb = jnp.concatenate([xu, xu_noise], axis=0)            # (2*TB, DP)

    # Layer 1 fully f32 (perturbation ~bf16 ulp; K=128 makes this cheap).
    h1 = jnp.dot(xb, w1_ref[...],
                 preferred_element_type=jnp.float32) + b1_ref[...]
    h1 = jnp.maximum(h1, 0.0)                               # (2TB, H1P)

    h2 = jnp.dot(h1.astype(jnp.bfloat16), w2_ref[...],
                 preferred_element_type=jnp.float32) + b2_ref[...]
    h2 = jnp.maximum(h2, 0.0)                               # (2TB, H2P)

    logits = jnp.dot(h2.astype(jnp.bfloat16), w3_ref[...],
                     preferred_element_type=jnp.float32) + b3_ref[...]

    # Mask padded option lanes, then numerically stable softmax (f32).
    lane = jax.lax.broadcasted_iota(jnp.int32, logits.shape, 1)
    logits = jnp.where(lane < option_num, logits, -1e30)
    m = jnp.max(logits, axis=-1, keepdims=True)
    e = jnp.exp(logits - m)
    probs = e / jnp.sum(e, axis=-1, keepdims=True)          # (2TB, OPTP)

    tb = xu.shape[0]
    o_ref[0] = probs[:tb].astype(o_ref.dtype)               # clean rows
    o_ref[1] = probs[tb:].astype(o_ref.dtype)               # noisy rows


def _encode_softmax(xu_pad, eps_pad, params, option_num, vat_noise, tile_b):
    """xu_pad/eps_pad: (B_pad, DP) f32.  Returns (2, B_pad, OPTP) f32 probs
    (axis 0: 0=clean, 1=noisy)."""
    b_pad, dp = xu_pad.shape
    w1, b1 = params["w1"], params["b1"]
    w2, b2 = params["w2"], params["b2"]
    w3, b3 = params["w3"], params["b3"]

    rows = 2 * b_pad
    nbytes = sum(a.size * a.dtype.itemsize
                 for a in (xu_pad, eps_pad, w1, b1, w2, b2, w3, b3))
    nbytes += 2 * b_pad * OPTP * 4                           # output
    cost = pl.CostEstimate(
        flops=2 * rows * (dp * H1P + H1P * H2P + H2P * OPTP),
        transcendentals=rows * OPTP,
        bytes_accessed=nbytes,
    )

    kernel = functools.partial(_option_encode_kernel,
                               option_num=option_num, vat_noise=vat_noise)

    return pl.pallas_call(
        kernel,
        out_shape=jax.ShapeDtypeStruct((2, b_pad, OPTP), jnp.float32),
        grid_spec=pltpu.PrefetchScalarGridSpec(
            num_scalar_prefetch=0,
            grid=(b_pad // tile_b,),
            in_specs=[
                pl.BlockSpec((tile_b, dp), lambda i: (i, 0)),    # xu tile
                pl.BlockSpec((tile_b, dp), lambda i: (i, 0)),    # eps tile
                pl.BlockSpec((dp, H1P), lambda i: (0, 0)),       # w1 (f32)
                pl.BlockSpec((1, H1P), lambda i: (0, 0)),        # b1
                pl.BlockSpec((H1P, H2P), lambda i: (0, 0)),      # w2 (bf16)
                pl.BlockSpec((1, H2P), lambda i: (0, 0)),        # b2
                pl.BlockSpec((H2P, OPTP), lambda i: (0, 0)),     # w3 (bf16)
                pl.BlockSpec((1, OPTP), lambda i: (0, 0)),       # b3
            ],
            out_specs=pl.BlockSpec((2, tile_b, OPTP), lambda i: (0, i, 0)),
        ),
        compiler_params=pltpu.CompilerParams(
            dimension_semantics=("parallel",)),
        cost_estimate=cost,
    )(xu_pad, eps_pad, w1, b1, w2, b2, w3, b3)


@functools.partial(jax.jit, static_argnames=("option_num", "vat_noise"))
def option_encode_forward(x, u, params, noise_key, option_num,
                          vat_noise=VAT_NOISE):
    """Matches OptionEncode.forward: returns (xu, xu, p_option, p_option_noise)."""
    b = x.shape[0]
    xu = jnp.concatenate([x, u], axis=1)                     # (B, S+A)
    d = xu.shape[1]
    assert d <= DP, f"feature dim {d} exceeds padded dim {DP}"
    eps = jax.random.normal(noise_key, xu.shape, xu.dtype)

    # TILE_B <= 256 keeps live f32 intermediates (~2*TILE_B*(512+384+128)*4 B)
    # comfortably under the default scoped VMEM on v5e/v6e/v7x.
    tile_b = 256 if b >= 256 else _round_up(b, 8)
    b_pad = _round_up(b, tile_b)

    xu_pad = jnp.zeros((b_pad, DP), jnp.float32).at[:b, :d].set(xu)
    eps_pad = jnp.zeros((b_pad, DP), jnp.float32).at[:b, :d].set(eps)

    probs = _encode_softmax(xu_pad, eps_pad, params, option_num,
                            vat_noise, tile_b)               # (2, B_pad, OPTP)
    p = probs[0, :b, :option_num]
    p_noise = probs[1, :b, :option_num]
    return xu, xu, p, p_noise


def init_params(key, in_dim, option_num):
    """Per-layer Linear weights stored [in, out], zero-padded to lane-dense
    shapes: in_dim->DP, 400->512, 300->384, opt->128.  w1 f32, w2/w3 bf16,
    biases f32."""
    keys = jax.random.split(key, 6)

    def uniform(k, shape, fan_in):
        bound = 1.0 / jnp.sqrt(fan_in)
        return jax.random.uniform(k, shape, jnp.float32, -bound, bound)

    w1 = jnp.zeros((DP, H1P), jnp.float32)
    w1 = w1.at[:in_dim, :H1].set(uniform(keys[0], (in_dim, H1), in_dim))
    b1 = jnp.zeros((1, H1P), jnp.float32)
    b1 = b1.at[:, :H1].set(uniform(keys[1], (1, H1), in_dim))

    w2 = jnp.zeros((H1P, H2P), jnp.float32)
    w2 = w2.at[:H1, :H2].set(uniform(keys[2], (H1, H2), H1))
    b2 = jnp.zeros((1, H2P), jnp.float32)
    b2 = b2.at[:, :H2].set(uniform(keys[3], (1, H2), H1))

    w3 = jnp.zeros((H2P, OPTP), jnp.float32)
    w3 = w3.at[:H2, :option_num].set(uniform(keys[4], (H2, option_num), H2))
    b3 = jnp.zeros((1, OPTP), jnp.float32)
    b3 = b3.at[:, :option_num].set(uniform(keys[5], (1, option_num), H2))

    return {
        "w1": w1, "b1": b1,                       # layer 1 stays f32
        "w2": w2.astype(jnp.bfloat16), "b2": b2,
        "w3": w3.astype(jnp.bfloat16), "b3": b3,
    }


def _reference_forward(x, u, params, noise_key, option_num,
                       vat_noise=VAT_NOISE):
    """Pure-JAX reference mirroring the kernel math exactly."""
    xu = jnp.concatenate([x, u], axis=1)
    eps = jax.random.normal(noise_key, xu.shape, xu.dtype)
    xu_noise = xu + vat_noise * eps * jnp.abs(xu)
    d = xu.shape[1]

    def enc(a):
        a_pad = jnp.zeros((a.shape[0], DP), jnp.float32).at[:, :d].set(a)
        h1 = jnp.maximum(
            jnp.dot(a_pad, params["w1"], preferred_element_type=jnp.float32,
                    precision=jax.lax.Precision.HIGHEST) + params["b1"], 0.0)
        h2 = jnp.maximum(
            jnp.dot(h1.astype(jnp.bfloat16), params["w2"],
                    preferred_element_type=jnp.float32) + params["b2"], 0.0)
        logits = jnp.dot(h2.astype(jnp.bfloat16), params["w3"],
                         preferred_element_type=jnp.float32) + params["b3"]
        return jax.nn.softmax(logits[:, :option_num], axis=-1)

    return xu, xu, enc(xu), enc(xu_noise)


if __name__ == "__main__":
    state_dim = 32
    action_dim = 8
    option_num = 3
    batch = 2

    key = jax.random.PRNGKey(0)
    kx, ku, kn, kp = jax.random.split(key, 4)
    x = jax.random.normal(kx, (batch, state_dim), jnp.float32)
    u = jax.random.normal(ku, (batch, action_dim), jnp.float32)
    params = init_params(kp, state_dim + action_dim, option_num)

    xu_a, xu_b, p_opt, p_opt_noise = option_encode_forward(
        x, u, params, kn, option_num)
    p_opt = jax.block_until_ready(p_opt)
    p_opt_noise = jax.block_until_ready(p_opt_noise)

    assert xu_a.shape == (batch, state_dim + action_dim), xu_a.shape
    assert p_opt.shape == (batch, option_num), p_opt.shape
    assert p_opt_noise.shape == (batch, option_num), p_opt_noise.shape

    # Reference with identical noise / identical padded weights.
    ref_xu, _, ref_clean, ref_noise = _reference_forward(
        x, u, params, kn, option_num)

    assert jnp.allclose(xu_a, ref_xu, atol=1e-6), "xu mismatch"
    assert jnp.allclose(p_opt, ref_clean, atol=2e-4, rtol=1e-3), \
        float(jnp.max(jnp.abs(p_opt - ref_clean)))
    assert jnp.allclose(p_opt_noise, ref_noise, atol=2e-4, rtol=1e-3), \
        float(jnp.max(jnp.abs(p_opt_noise - ref_noise)))
    assert jnp.allclose(jnp.sum(p_opt, axis=-1), 1.0, atol=1e-5)
    assert jnp.allclose(jnp.sum(p_opt_noise, axis=-1), 1.0, atol=1e-5)

    print("KERNEL_OK")
</pallas_src>

<mosaic_0001>
module attributes {stable_mosaic.version = 11 : i64} {
  func.func @_option_encode_kernel(%arg0: i32, %arg1: memref<8x128xf32, #tpu.memory_space<vmem>>, %arg2: memref<8x128xf32, #tpu.memory_space<vmem>>, %arg3: memref<128x512xf32, #tpu.memory_space<vmem>>, %arg4: memref<1x512xf32, #tpu.memory_space<vmem>>, %arg5: memref<512x384xbf16, #tpu.memory_space<vmem>>, %arg6: memref<1x384xf32, #tpu.memory_space<vmem>>, %arg7: memref<384x128xbf16, #tpu.memory_space<vmem>>, %arg8: memref<1x128xf32, #tpu.memory_space<vmem>>, %arg9: memref<2x8x128xf32, #tpu.memory_space<vmem>>) attributes {dimension_semantics = [#tpu.dimension_semantics<parallel>], iteration_bounds = array<i64: 1>, scalar_prefetch = 0 : i64, scratch_operands = 0 : i64, tpu.core_type = #tpu.core_type<tc>, window_params = [{transform_indices = @transform_0, window_bounds = array<i64: 8, 128>}, {transform_indices = @transform_1, window_bounds = array<i64: 8, 128>}, {pipeline_mode = #tpu.pipeline_mode<synchronous>, transform_indices = @transform_2, window_bounds = array<i64: 128, 512>}, {pipeline_mode = #tpu.pipeline_mode<synchronous>, transform_indices = @transform_3, window_bounds = array<i64: 1, 512>}, {pipeline_mode = #tpu.pipeline_mode<synchronous>, transform_indices = @transform_4, window_bounds = array<i64: 512, 384>}, {pipeline_mode = #tpu.pipeline_mode<synchronous>, transform_indices = @transform_5, window_bounds = array<i64: 1, 384>}, {pipeline_mode = #tpu.pipeline_mode<synchronous>, transform_indices = @transform_6, window_bounds = array<i64: 384, 128>}, {pipeline_mode = #tpu.pipeline_mode<synchronous>, transform_indices = @transform_7, window_bounds = array<i64: 1, 128>}, {transform_indices = @transform_8, window_bounds = array<i64: 2, 8, 128>}]} {
    %c0 = arith.constant 0 : index
    %c0_0 = arith.constant 0 : index
    %0 = vector.load %arg1[%c0, %c0_0] : memref<8x128xf32, #tpu.memory_space<vmem>>, vector<8x128xf32>
    %c0_1 = arith.constant 0 : index
    %c0_2 = arith.constant 0 : index
    %1 = vector.load %arg2[%c0_1, %c0_2] : memref<8x128xf32, #tpu.memory_space<vmem>>, vector<8x128xf32>
    %cst = arith.constant 5.000000e-03 : f32
    %2 = vector.broadcast %cst : f32 to vector<8x128xf32>
    %3 = arith.mulf %2, %1 : vector<8x128xf32>
    %4 = math.absf %0 : vector<8x128xf32>
    %5 = arith.mulf %3, %4 : vector<8x128xf32>
    %6 = arith.addf %0, %5 : vector<8x128xf32>
    %7 = tpu.concatenate %0, %6 in 0 : vector<8x128xf32>, vector<8x128xf32> -> vector<16x128xf32>
    %c0_3 = arith.constant 0 : index
    %c0_4 = arith.constant 0 : index
    %8 = vector.load %arg3[%c0_3, %c0_4] : memref<128x512xf32, #tpu.memory_space<vmem>>, vector<128x512xf32>
    %cst_5 = arith.constant dense<0.000000e+00> : vector<16x512xf32>
    %9 = tpu.matmul %7, %8, %cst_5 {dimension_numbers = #tpu.dot_dimension_numbers<[1], [0], [0], [1], [0, 0, 1, 1], [], []>} : vector<16x128xf32>, vector<128x512xf32>, vector<16x512xf32> -> vector<16x512xf32>
    %c0_6 = arith.constant 0 : index
    %c0_7 = arith.constant 0 : index
    %10 = vector.load %arg4[%c0_6, %c0_7] : memref<1x512xf32, #tpu.memory_space<vmem>>, vector<1x512xf32>
    %11 = vector.broadcast %10 : vector<1x512xf32> to vector<16x512xf32>
    %12 = arith.addf %9, %11 : vector<16x512xf32>
    %cst_8 = arith.constant 0.000000e+00 : f32
    %13 = vector.broadcast %cst_8 : f32 to vector<16x512xf32>
    %14 = arith.maximumf %12, %13 : vector<16x512xf32>
    %15 = arith.truncf %14 : vector<16x512xf32> to vector<16x512xbf16>
    %c0_9 = arith.constant 0 : index
    %c0_10 = arith.constant 0 : index
    %16 = vector.load %arg5[%c0_9, %c0_10] : memref<512x384xbf16, #tpu.memory_space<vmem>>, vector<512x384xbf16>
    %cst_11 = arith.constant dense<0.000000e+00> : vector<16x384xf32>
    %17 = tpu.matmul %15, %16, %cst_11 {dimension_numbers = #tpu.dot_dimension_numbers<[1], [0], [0], [1], [0, 0, 1, 1], [], []>} : vector<16x512xbf16>, vector<512x384xbf16>, vector<16x384xf32> -> vector<16x384xf32>
    %c0_12 = arith.constant 0 : index
    %c0_13 = arith.constant 0 : index
    %18 = vector.load %arg6[%c0_12, %c0_13] : memref<1x384xf32, #tpu.memory_space<vmem>>, vector<1x384xf32>
    %19 = vector.broadcast %18 : vector<1x384xf32> to vector<16x384xf32>
    %20 = arith.addf %17, %19 : vector<16x384xf32>
    %cst_14 = arith.constant 0.000000e+00 : f32
    %21 = vector.broadcast %cst_14 : f32 to vector<16x384xf32>
    %22 = arith.maximumf %20, %21 : vector<16x384xf32>
    %23 = arith.truncf %22 : vector<16x384xf32> to vector<16x384xbf16>
    %c0_15 = arith.constant 0 : index
    %c0_16 = arith.constant 0 : index
    %24 = vector.load %arg7[%c0_15, %c0_16] : memref<384x128xbf16, #tpu.memory_space<vmem>>, vector<384x128xbf16>
    %cst_17 = arith.constant dense<0.000000e+00> : vector<16x128xf32>
    %25 = tpu.matmul %23, %24, %cst_17 {dimension_numbers = #tpu.dot_dimension_numbers<[1], [0], [0], [1], [0, 0, 1, 1], [], []>} : vector<16x384xbf16>, vector<384x128xbf16>, vector<16x128xf32> -> vector<16x128xf32>
    %c0_18 = arith.constant 0 : index
    %c0_19 = arith.constant 0 : index
    %26 = vector.load %arg8[%c0_18, %c0_19] : memref<1x128xf32, #tpu.memory_space<vmem>>, vector<1x128xf32>
    %27 = vector.broadcast %26 : vector<1x128xf32> to vector<16x128xf32>
    %28 = arith.addf %25, %27 : vector<16x128xf32>
    %29 = tpu.iota {dimensions = array<i32: 1>} : vector<16x128xi32>
    %c3_i32 = arith.constant 3 : i32
    %30 = vector.broadcast %c3_i32 : i32 to vector<16x128xi32>
    %31 = arith.cmpi slt, %29, %30 : vector<16x128xi32>
    %cst_20 = arith.constant -1.000000e+30 : f32
    %32 = vector.broadcast %cst_20 : f32 to vector<16x128xf32>
    %33 = arith.select %31, %28, %32 : vector<16x128xi1>, vector<16x128xf32>
    %cst_21 = arith.constant dense<0xFF800000> : vector<16xf32>
    %34 = vector.multi_reduction <maximumf>, %33, %cst_21 [1] : vector<16x128xf32> to vector<16xf32>
    %35 = vector.shape_cast %34 : vector<16xf32> to vector<16x1xf32>
    %36 = vector.broadcast %35 : vector<16x1xf32> to vector<16x128xf32>
    %37 = arith.subf %33, %36 : vector<16x128xf32>
    %38 = math.exp %37 : vector<16x128xf32>
    %cst_22 = arith.constant dense<0.000000e+00> : vector<16xf32>
    %39 = vector.multi_reduction <add>, %38, %cst_22 [1] : vector<16x128xf32> to vector<16xf32>
    %40 = vector.shape_cast %39 : vector<16xf32> to vector<16x1xf32>
    %41 = vector.broadcast %40 : vector<16x1xf32> to vector<16x128xf32>
    %42 = arith.divf %38, %41 : vector<16x128xf32>
    %43 = vector.extract_strided_slice %42 {offsets = [0, 0], sizes = [8, 128], strides = [1, 1]} : vector<16x128xf32> to vector<8x128xf32>
    %c0_23 = arith.constant 0 : index
    %c0_24 = arith.constant 0 : index
    %c0_25 = arith.constant 0 : index
    %44 = vector.load %arg9[%c0_23, %c0_24, %c0_25] : memref<2x8x128xf32, #tpu.memory_space<vmem>>, vector<1x8x128xf32>
    %45 = vector.shape_cast %44 : vector<1x8x128xf32> to vector<8x128xf32>
    %46 = vector.shape_cast %43 : vector<8x128xf32> to vector<1x8x128xf32>
    tpu.vector_store %arg9[%c0_23, %c0_24, %c0_25], %46 {strides = array<i32>} : memref<2x8x128xf32, #tpu.memory_space<vmem>>, vector<1x8x128xf32>,
    %47 = vector.extract_strided_slice %42 {offsets = [8, 0], sizes = [8, 128], strides = [1, 1]} : vector<16x128xf32> to vector<8x128xf32>
    %c1 = arith.constant 1 : index
    %c0_26 = arith.constant 0 : index
    %c0_27 = arith.constant 0 : index
    %48 = vector.load %arg9[%c1, %c0_26, %c0_27] : memref<2x8x128xf32, #tpu.memory_space<vmem>>, vector<1x8x128xf32>
    %49 = vector.shape_cast %48 : vector<1x8x128xf32> to vector<8x128xf32>
    %50 = vector.shape_cast %47 : vector<8x128xf32> to vector<1x8x128xf32>
    tpu.vector_store %arg9[%c1, %c0_26, %c0_27], %50 {strides = array<i32>} : memref<2x8x128xf32, #tpu.memory_space<vmem>>, vector<1x8x128xf32>,
    return
  }
  func.func @transform_0(%arg0: i32) -> (i32, i32) {
    %c0_i32 = arith.constant 0 : i32
    %c0_i32_0 = arith.constant 0 : i32
    return %arg0, %c0_i32 : i32, i32
  }
  func.func @transform_1(%arg0: i32) -> (i32, i32) {
    %c0_i32 = arith.constant 0 : i32
    %c0_i32_0 = arith.constant 0 : i32
    return %arg0, %c0_i32 : i32, i32
  }
  func.func @transform_2(%arg0: i32) -> (i32, i32) {
    %c0_i32 = arith.constant 0 : i32
    %c0_i32_0 = arith.constant 0 : i32
    %c0_i32_1 = arith.constant 0 : i32
    return %c0_i32, %c0_i32_0 : i32, i32
  }
  func.func @transform_3(%arg0: i32) -> (i32, i32) {
    %c0_i32 = arith.constant 0 : i32
    %c0_i32_0 = arith.constant 0 : i32
    %c0_i32_1 = arith.constant 0 : i32
    return %c0_i32, %c0_i32_0 : i32, i32
  }
  func.func @transform_4(%arg0: i32) -> (i32, i32) {
    %c0_i32 = arith.constant 0 : i32
    %c0_i32_0 = arith.constant 0 : i32
    %c0_i32_1 = arith.constant 0 : i32
    return %c0_i32, %c0_i32_0 : i32, i32
  }
  func.func @transform_5(%arg0: i32) -> (i32, i32) {
    %c0_i32 = arith.constant 0 : i32
    %c0_i32_0 = arith.constant 0 : i32
    %c0_i32_1 = arith.constant 0 : i32
    return %c0_i32, %c0_i32_0 : i32, i32
  }
  func.func @transform_6(%arg0: i32) -> (i32, i32) {
    %c0_i32 = arith.constant 0 : i32
    %c0_i32_0 = arith.constant 0 : i32
    %c0_i32_1 = arith.constant 0 : i32
    return %c0_i32, %c0_i32_0 : i32, i32
  }
  func.func @transform_7(%arg0: i32) -> (i32, i32) {
    %c0_i32 = arith.constant 0 : i32
    %c0_i32_0 = arith.constant 0 : i32
    %c0_i32_1 = arith.constant 0 : i32
    return %c0_i32, %c0_i32_0 : i32, i32
  }
  func.func @transform_8(%arg0: i32) -> (i32, i32, i32) {
    %c0_i32 = arith.constant 0 : i32
    %c0_i32_0 = arith.constant 0 : i32
    %c0_i32_1 = arith.constant 0 : i32
    return %c0_i32, %arg0, %c0_i32_0 : i32, i32, i32
  }
}

</mosaic_0001>

<llo_original>
// kernel: option_encode_forward.1
$region0: #{option_encode_forward.1}
  #allocation0 [shape = 'u32[]', space=smem, size = 0x4, offset = 0x4, fixed_abs, tag = 'smem constant byte address 0x4 - core index']
  #allocation1 [shape = 'u32[144,128]{1,0:T(1,128)}', space=vmem, size = 0x12000, scoped, tag = 'internal scratch']
  %s0 = inlined_call_operand.vmem [shape: f32[8,128], index: 0, kind: input, shape index: {}]
  %s1 = inlined_call_operand.vmem [shape: f32[8,128], index: 1, kind: input, shape index: {}]
  %s2 = inlined_call_operand.hbm [shape: f32[128,512], index: 2, kind: input, shape index: {}]
  %s3 = inlined_call_operand.vmem [shape: f32[1,512], index: 3, kind: input, shape index: {}]
  %s4 = inlined_call_operand.hbm [shape: bf16[512,384], index: 4, kind: input, shape index: {}]
  %s5 = inlined_call_operand.vmem [shape: f32[1,384], index: 5, kind: input, shape index: {}]
  %s6 = inlined_call_operand.hbm [shape: bf16[384,128], index: 6, kind: input, shape index: {}]
  %s7 = inlined_call_operand.vmem [shape: f32[1,128], index: 7, kind: input, shape index: {}]
  %s8 = inlined_call_operand.vmem [shape: f32[2,8,128], index: 8, kind: output, shape index: {}]
  %s9 = sld [smem:[#allocation0]]
  $region54: #{option_encode_forward.1} parent=0
    _
  %s11 = ssub.s32 1, %s9
  %s12 = scalar_select 0, %s11, %s9
  $region1: #{option_encode_forward.1} parent=0
    #allocation2 [shape = 'u8[262144]{0}', space=vmem, size = 0x40000, scoped, tag = 'input window, operand 2, single buffered']
    #allocation3 [shape = 's32[1]{0}', space=sflag, size = 0x4, scoped, tag = 'scoped memory for option_encode_forward.1']
    #allocation4 [shape = 'u8[393216]{0}', space=vmem, size = 0x60000, scoped, tag = 'input window, operand 4, single buffered']
    #allocation5 [shape = 's32[1]{0}', space=sflag, size = 0x4, scoped, tag = 'scoped memory for option_encode_forward.1']
    #allocation6 [shape = 'u8[98304]{0}', space=vmem, size = 0x18000, scoped, tag = 'input window, operand 6, single buffered']
    %13 = vsyncpa [#allocation3], 0
    %14 = vsyncpa [#allocation5], 0
    // Predicated region
    $region2: #{option_encode_forward.1} parent=1 // pred_check
      _
    $region3: #{option_encode_forward.1} parent=1 // pred_check_branch
      %16 = sbr.rel (0) target = $region5
    $region4: #{option_encode_forward.1} parent=1 // pred_region
      _
    $region5: #{option_encode_forward.1} parent=1 // pred_fallthru
      _
    // Predicated region
    $region6: #{option_encode_forward.1} parent=1 // pred_check
      _
    $region7: #{option_encode_forward.1} parent=1 // pred_check_branch
      %18 = sbr.rel (0) target = $region9
    $region8: #{option_encode_forward.1} parent=1 // pred_region
      _
    $region9: #{option_encode_forward.1} parent=1 // pred_fallthru
      _
    // Predicated region
    $region10: #{option_encode_forward.1} parent=1 // pred_check
      _
    $region11: #{option_encode_forward.1} parent=1 // pred_check_branch
      %20 = sbr.rel (0) target = $region13
    $region12: #{option_encode_forward.1} parent=1 // pred_region
      %s22 = ssub.s32 8192, 8192
      %23 = vsyncadd [#allocation3], %s22
      %s24 = sshll.u32 [#allocation2], 4
      %s25 = int_to_ptr.vmem [resolvable:$true] %s24
      %30 = dma.hbm_to_vmem [thread:$0]  %s2, 8192, %s25, [#allocation3], 512, 512, 32
    $region13: #{option_encode_forward.1} parent=1 // pred_fallthru
      _
    // Predicated region
    $region14: #{option_encode_forward.1} parent=1 // pred_check
      _
    $region15: #{option_encode_forward.1} parent=1 // pred_check_branch
      %32 = sbr.rel (0) target = $region17
    $region16: #{option_encode_forward.1} parent=1 // pred_region
      _
    $region17: #{option_encode_forward.1} parent=1 // pred_fallthru
      _
    // Predicated region
    $region18: #{option_encode_forward.1} parent=1 // pred_check
      _
    $region19: #{option_encode_forward.1} parent=1 // pred_check_branch
      %34 = sbr.rel (0) target = $region21
    $region20: #{option_encode_forward.1} parent=1 // pred_region
      %s36 = ssub.s32 12288, 12288
      %37 = vsyncadd [#allocation5], %s36
      %s38 = sshll.u32 [#allocation4], 4
      %s39 = int_to_ptr.vmem [resolvable:$true] %s38
      %44 = dma.hbm_to_vmem [thread:$0]  %s4, 12288, %s39, [#allocation5], 192, 192, 12
    $region21: #{option_encode_forward.1} parent=1 // pred_fallthru
      _
    // Predicated region
    $region22: #{option_encode_forward.1} parent=1 // pred_check
      _
    $region23: #{option_encode_forward.1} parent=1 // pred_check_branch
      %46 = sbr.rel (0) target = $region25
    $region24: #{option_encode_forward.1} parent=1 // pred_region
      _
    $region25: #{option_encode_forward.1} parent=1 // pred_fallthru
      _
    // Predicated region
    $region26: #{option_encode_forward.1} parent=1 // pred_check
      _
    $region27: #{option_encode_forward.1} parent=1 // pred_check_branch
      %48 = sbr.rel (0) target = $region29
    $region28: #{option_encode_forward.1} parent=1 // pred_region
      %s50 = ssub.s32 3072, 3072
      %51 = vsyncadd [#allocation5], %s50
      %s52 = sshll.u32 [#allocation6], 4
      %s53 = int_to_ptr.vmem [resolvable:$true] %s52
      %58 = dma.hbm_to_vmem [thread:$0]  %s6, 3072, %s53, [#allocation5], 64, 64, 4
    $region29: #{option_encode_forward.1} parent=1 // pred_fallthru
      _
    // Predicated region
    $region30: #{option_encode_forward.1} parent=1 // pred_check
      _
    $region31: #{option_encode_forward.1} parent=1 // pred_check_branch
      %60 = sbr.rel (0) target = $region33
    $region32: #{option_encode_forward.1} parent=1 // pred_region
      _
    $region33: #{option_encode_forward.1} parent=1 // pred_fallthru
      _
    // Predicated region
    $region34: #{option_encode_forward.1} parent=1 // pred_check
      _
    $region35: #{option_encode_forward.1} parent=1 // pred_check_branch
      %62 = sbr.rel (0) target = $region37
    $region36: #{option_encode_forward.1} parent=1 // pred_region
      %63 = dma.done [#allocation3], 8192
    $region37: #{option_encode_forward.1} parent=1 // pred_fallthru
      _
    // Predicated region
    $region38: #{option_encode_forward.1} parent=1 // pred_check
      _
    $region39: #{option_encode_forward.1} parent=1 // pred_check_branch
      %65 = sbr.rel (0) target = $region41
    $region40: #{option_encode_forward.1} parent=1 // pred_region
      %66 = dma.done [#allocation5], 12288
    $region41: #{option_encode_forward.1} parent=1 // pred_fallthru
      _
    // Predicated region
    $region42: #{option_encode_forward.1} parent=1 // pred_check
      _
    $region43: #{option_encode_forward.1} parent=1 // pred_check_branch
      %68 = sbr.rel (0) target = $region45
    $region44: #{option_encode_forward.1} parent=1 // pred_region
      %69 = dma.done [#allocation5], 3072
    $region45: #{option_encode_forward.1} parent=1 // pred_fallthru
      _
    %v71 = vld [vmem:[%s0] sm:$0xff]
    %v72 = vld [vmem:[%s1] sm:$0xff]
    %v73 = vmul.f32 %v72, 0.005
    %v74 = vand.u32 2147483647, %v71
    %v75 = vmul.f32 %v73, %v74
    %v76 = vadd.f32 %v71, %v75
    %v77 = vld [vmem:[#allocation2] sm:$0xff]
    %v78 = vld [vmem:[#allocation2 + $0x8] sm:$0xff]
    %v79 = vld [vmem:[#allocation2 + $0x10] sm:$0xff]
    %v80 = vld [vmem:[#allocation2 + $0x18] sm:$0xff]
    %v81 = vld [vmem:[#allocation2 + $0x20] sm:$0xff]
    %v82 = vld [vmem:[#allocation2 + $0x28] sm:$0xff]
    %v83 = vld [vmem:[#allocation2 + $0x30] sm:$0xff]
    %v84 = vld [vmem:[#allocation2 + $0x38] sm:$0xff]
    %v85 = vld [vmem:[#allocation2 + $0x40] sm:$0xff]
    %v86 = vld [vmem:[#allocation2 + $0x48] sm:$0xff]
    %v87 = vld [vmem:[#allocation2 + $0x50] sm:$0xff]
    %v88 = vld [vmem:[#allocation2 + $0x58] sm:$0xff]
    %v89 = vld [vmem:[#allocation2 + $0x60] sm:$0xff]
    %v90 = vld [vmem:[#allocation2 + $0x68] sm:$0xff]
    %v91 = vld [vmem:[#allocation2 + $0x70] sm:$0xff]
    %v92 = vld [vmem:[#allocation2 + $0x78] sm:$0xff]
    %v93 = vld [vmem:[#allocation2 + $0x80] sm:$0xff]
    %v94 = vld [vmem:[#allocation2 + $0x88] sm:$0xff]
    %v95 = vld [vmem:[#allocation2 + $0x90] sm:$0xff]
    %v96 = vld [vmem:[#allocation2 + $0x98] sm:$0xff]
    %v97 = vld [vmem:[#allocation2 + $0xa0] sm:$0xff]
    %v98 = vld [vmem:[#allocation2 + $0xa8] sm:$0xff]
    %v99 = vld [vmem:[#allocation2 + $0xb0] sm:$0xff]
    %v100 = vld [vmem:[#allocation2 + $0xb8] sm:$0xff]
    %v101 = vld [vmem:[#allocation2 + $0xc0] sm:$0xff]
    %v102 = vld [vmem:[#allocation2 + $0xc8] sm:$0xff]
    %v103 = vld [vmem:[#allocation2 + $0xd0] sm:$0xff]
    %v104 = vld [vmem:[#allocation2 + $0xd8] sm:$0xff]
    %v105 = vld [vmem:[#allocation2 + $0xe0] sm:$0xff]
    %v106 = vld [vmem:[#allocation2 + $0xe8] sm:$0xff]
    %v107 = vld [vmem:[#allocation2 + $0xf0] sm:$0xff]
    %v108 = vld [vmem:[#allocation2 + $0xf8] sm:$0xff]
    %v109 = vld [vmem:[#allocation2 + $0x100] sm:$0xff]
    %v110 = vld [vmem:[#allocation2 + $0x108] sm:$0xff]
    %v111 = vld [vmem:[#allocation2 + $0x110] sm:$0xff]
    %v112 = vld [vmem:[#allocation2 + $0x118] sm:$0xff]
    %v113 = vld [vmem:[#allocation2 + $0x120] sm:$0xff]
    %v114 = vld [vmem:[#allocation2 + $0x128] sm:$0xff]
    %v115 = vld [vmem:[#allocation2 + $0x130] sm:$0xff]
    %v116 = vld [vmem:[#allocation2 + $0x138] sm:$0xff]
    %v117 = vld [vmem:[#allocation2 + $0x140] sm:$0xff]
    %v118 = vld [vmem:[#allocation2 + $0x148] sm:$0xff]
    %v119 = vld [vmem:[#allocation2 + $0x150] sm:$0xff]
    %v120 = vld [vmem:[#allocation2 + $0x158] sm:$0xff]
    %v121 = vld [vmem:[#allocation2 + $0x160] sm:$0xff]
    %v122 = vld [vmem:[#allocation2 + $0x168] sm:$0xff]
    %v123 = vld [vmem:[#allocation2 + $0x170] sm:$0xff]
    %v124 = vld [vmem:[#allocation2 + $0x178] sm:$0xff]
    %v125 = vld [vmem:[#allocation2 + $0x180] sm:$0xff]
    %v126 = vld [vmem:[#allocation2 + $0x188] sm:$0xff]
    %v127 = vld [vmem:[#allocation2 + $0x190] sm:$0xff]
    %v128 = vld [vmem:[#allocation2 + $0x198] sm:$0xff]
    %v129 = vld [vmem:[#allocation2 + $0x1a0] sm:$0xff]
    %v130 = vld [vmem:[#allocation2 + $0x1a8] sm:$0xff]
    %v131 = vld [vmem:[#allocation2 + $0x1b0] sm:$0xff]
    %v132 = vld [vmem:[#allocation2 + $0x1b8] sm:$0xff]
    %v133 = vld [vmem:[#allocation2 + $0x1c0] sm:$0xff]
    %v134 = vld [vmem:[#allocation2 + $0x1c8] sm:$0xff]
    %v135 = vld [vmem:[#allocation2 + $0x1d0] sm:$0xff]
    %v136 = vld [vmem:[#allocation2 + $0x1d8] sm:$0xff]
    %v137 = vld [vmem:[#allocation2 + $0x1e0] sm:$0xff]
    %v138 = vld [vmem:[#allocation2 + $0x1e8] sm:$0xff]
    %v139 = vld [vmem:[#allocation2 + $0x1f0] sm:$0xff]
    %v140 = vld [vmem:[#allocation2 + $0x1f8] sm:$0xff]
    %v141 = vld [vmem:[%s3] sm:$0xf]
    %v143 = vlaneseq
    %v144 = vshrl.u32 %v143, 7
    %v145 = vsub.s32 0, %v144
    %v146 = vrot.slane %v141, %v145
    %v147 = vlaneseq
    %v148 = vshrl.u32 %v147, 7
    %v149 = vsub.s32 1, %v148
    %v150 = vrot.slane %v141, %v149
    %v151 = vlaneseq
    %v152 = vshrl.u32 %v151, 7
    %v153 = vsub.s32 2, %v152
    %v154 = vrot.slane %v141, %v153
    %v155 = vlaneseq
    %v156 = vshrl.u32 %v155, 7
    %v157 = vsub.s32 3, %v156
    %v158 = vrot.slane %v141, %v157
    %163 = vmatprep.subr.mxu0 %v78
    %164 = vmatpush1.msra.mxu0 %v77
    %165 = vmatprep.subr.mxu0 %v82
    %166 = vmatpush1.msra.mxu0 %v81
    %167 = vmatprep.subr.mxu0 %v86
    %168 = vmatpush1.msra.mxu0 %v85
    %169 = vmatprep.subr.mxu0 %v90
    %170 = vmatpush1.msra.mxu0 %v89
    %171 = vmatprep.subr.mxu0 %v94
    %172 = vmatpush1.msra.mxu0 %v93
    %173 = vmatprep.subr.mxu0 %v98
    %174 = vmatpush1.msra.mxu0 %v97
    %175 = vmatprep.subr.mxu0 %v102
    %176 = vmatpush1.msra.mxu0 %v101
    %177 = vmatprep.subr.mxu0 %v106
    %178 = vmatpush1.msra.mxu0 %v105
    %179 = vmatprep.subr.mxu0 %v110
    %180 = vmatpush1.msra.mxu0 %v109
    %181 = vmatprep.subr.mxu0 %v114
    %182 = vmatpush1.msra.mxu0 %v113
    %183 = vmatprep.subr.mxu0 %v118
    %184 = vmatpush1.msra.mxu0 %v117
    %185 = vmatprep.subr.mxu0 %v122
    %186 = vmatpush1.msra.mxu0 %v121
    %187 = vmatprep.subr.mxu0 %v126
    %188 = vmatpush1.msra.mxu0 %v125
    %189 = vmatprep.subr.mxu0 %v130
    %190 = vmatpush1.msra.mxu0 %v129
    %191 = vmatprep.subr.mxu0 %v134
    %192 = vmatpush1.msra.mxu0 %v133
    %193 = vmatprep.subr.mxu0 %v138
    %194 = vmatpush1.msra.mxu0 %v137
    %195 = vmatprep.subr.mxu0 0.0
    %196 = vmatpush1.msra.mxu0 0.0
    %197 = vmatprep.subr.mxu0 0.0
    %198 = vmatpush1.msra.mxu0 0.0
    %199 = vmatprep.subr.mxu0 0.0
    %200 = vmatpush1.msra.mxu0 0.0
    %201 = vmatprep.subr.mxu0 0.0
    %202 = vmatpush1.msra.mxu0 0.0
    %203 = vmatprep.subr.mxu0 0.0
    %204 = vmatpush1.msra.mxu0 0.0
    %205 = vmatprep.subr.mxu0 0.0
    %206 = vmatpush1.msra.mxu0 0.0
    %207 = vmatprep.subr.mxu0 0.0
    %208 = vmatpush1.msra.mxu0 0.0
    %209 = vmatprep.subr.mxu0 0.0
    %210 = vmatpush1.msra.mxu0 0.0
    %211 = vmatprep.subr.mxu0 0.0
    %212 = vmatpush1.msra.mxu0 0.0
    %213 = vmatprep.subr.mxu0 0.0
    %214 = vmatpush1.msra.mxu0 0.0
    %215 = vmatprep.subr.mxu0 0.0
    %216 = vmatpush1.msra.mxu0 0.0
    %217 = vmatprep.subr.mxu0 0.0
    %218 = vmatpush1.msra.mxu0 0.0
    %219 = vmatprep.subr.mxu0 0.0
    %220 = vmatpush1.msra.mxu0 0.0
    %221 = vmatprep.subr.mxu0 0.0
    %222 = vmatpush1.msra.mxu0 0.0
    %223 = vmatprep.subr.mxu0 0.0
    %224 = vmatpush1.msra.mxu0 0.0
    %225 = vmatprep.subr.mxu0 0.0
    %226 = vmatpush1.msra.mxu0 0.0
    %227 = vmatprep.mubr.f32.mxu0 0.0
    %228 = vmatmul.mubr.f32.gmra.mrb[0].mxu0 %v71
    %v229 = vpop.f32.mrb[0].mxu0
    %v230 = vadd.f32 %v146, %v229
    %v231 = vpop.f32.mrb[0].mxu0
    %v232 = vadd.f32 %v150, %v231
    %233 = vmatprep.mubr.f32.mxu0 0.0
    %234 = vmatmul.mubr.f32.gmra.mrb[0].mxu0 %v76
    %v235 = vpop.f32.mrb[0].mxu0
    %v236 = vadd.f32 %v146, %v235
    %v237 = vpop.f32.mrb[0].mxu0
    %v238 = vadd.f32 %v150, %v237
    %239 = vdwg.mxu0
    %240 = vmatprep.subr.mxu0 %v80
    %241 = vmatpush1.msra.mxu0 %v79
    %242 = vmatprep.subr.mxu0 %v84
    %243 = vmatpush1.msra.mxu0 %v83
    %244 = vmatprep.subr.mxu0 %v88
    %245 = vmatpush1.msra.mxu0 %v87
    %246 = vmatprep.subr.mxu0 %v92
    %247 = vmatpush1.msra.mxu0 %v91
    %248 = vmatprep.subr.mxu0 %v96
    %249 = vmatpush1.msra.mxu0 %v95
    %250 = vmatprep.subr.mxu0 %v100
    %251 = vmatpush1.msra.mxu0 %v99
    %252 = vmatprep.subr.mxu0 %v104
    %253 = vmatpush1.msra.mxu0 %v103
    %254 = vmatprep.subr.mxu0 %v108
    %255 = vmatpush1.msra.mxu0 %v107
    %256 = vmatprep.subr.mxu0 %v112
    %257 = vmatpush1.msra.mxu0 %v111
    %258 = vmatprep.subr.mxu0 %v116
    %259 = vmatpush1.msra.mxu0 %v115
    %260 = vmatprep.subr.mxu0 %v120
    %261 = vmatpush1.msra.mxu0 %v119
    %262 = vmatprep.subr.mxu0 %v124
    %263 = vmatpush1.msra.mxu0 %v123
    %264 = vmatprep.subr.mxu0 %v128
    %265 = vmatpush1.msra.mxu0 %v127
    %266 = vmatprep.subr.mxu0 %v132
    %267 = vmatpush1.msra.mxu0 %v131
    %268 = vmatprep.subr.mxu0 %v136
    %269 = vmatpush1.msra.mxu0 %v135
    %270 = vmatprep.subr.mxu0 %v140
    %271 = vmatpush1.msra.mxu0 %v139
    %272 = vmatprep.subr.mxu0 0.0
    %273 = vmatpush1.msra.mxu0 0.0
    %274 = vmatprep.subr.mxu0 0.0
    %275 = vmatpush1.msra.mxu0 0.0
    %276 = vmatprep.subr.mxu0 0.0
    %277 = vmatpush1.msra.mxu0 0.0
    %278 = vmatprep.subr.mxu0 0.0
    %279 = vmatpush1.msra.mxu0 0.0
    %280 = vmatprep.subr.mxu0 0.0
    %281 = vmatpush1.msra.mxu0 0.0
    %282 = vmatprep.subr.mxu0 0.0
    %283 = vmatpush1.msra.mxu0 0.0
    %284 = vmatprep.subr.mxu0 0.0
    %285 = vmatpush1.msra.mxu0 0.0
    %286 = vmatprep.subr.mxu0 0.0
    %287 = vmatpush1.msra.mxu0 0.0
    %288 = vmatprep.subr.mxu0 0.0
    %289 = vmatpush1.msra.mxu0 0.0
    %290 = vmatprep.subr.mxu0 0.0
    %291 = vmatpush1.msra.mxu0 0.0
    %292 = vmatprep.subr.mxu0 0.0
    %293 = vmatpush1.msra.mxu0 0.0
    %294 = vmatprep.subr.mxu0 0.0
    %295 = vmatpush1.msra.mxu0 0.0
    %296 = vmatprep.subr.mxu0 0.0
    %297 = vmatpush1.msra.mxu0 0.0
    %298 = vmatprep.subr.mxu0 0.0
    %299 = vmatpush1.msra.mxu0 0.0
    %300 = vmatprep.subr.mxu0 0.0
    %301 = vmatpush1.msra.mxu0 0.0
    %302 = vmatprep.subr.mxu0 0.0
    %303 = vmatpush1.msra.mxu0 0.0
    %304 = vmatprep.mubr.f32.mxu0 0.0
    %305 = vmatmul.mubr.f32.gmra.mrb[0].mxu0 %v71
    %v306 = vpop.f32.mrb[0].mxu0
    %v307 = vadd.f32 %v154, %v306
    %v308 = vpop.f32.mrb[0].mxu0
    %v309 = vadd.f32 %v158, %v308
    %310 = vmatprep.mubr.f32.mxu0 0.0
    %311 = vmatmul.mubr.f32.gmra.mrb[0].mxu0 %v76
    %v312 = vpop.f32.mrb[0].mxu0
    %v313 = vadd.f32 %v154, %v312
    %v314 = vpop.f32.mrb[0].mxu0
    %v315 = vadd.f32 %v158, %v314
    %316 = vdwg.mxu0
    %v317 = vmax.f32 %v230, 0.0
    %v318 = vmax.f32 %v232, 0.0
    %v319 = vmax.f32 %v307, 0.0
    %v320 = vmax.f32 %v309, 0.0
    %v321 = vmax.f32 %v236, 0.0
    %v322 = vmax.f32 %v238, 0.0
    %v323 = vmax.f32 %v313, 0.0
    %v324 = vmax.f32 %v315, 0.0
    %v325 = vpack.c.bf16 %v321, %v317
    %v326 = vpack.c.bf16 %v322, %v318
    %v327 = vpack.c.bf16 %v323, %v319
    %v328 = vpack.c.bf16 %v324, %v320
    %v329 = vld [vmem:[#allocation4] sm:$0xff]
    %v330 = vld [vmem:[#allocation4 + $0x8] sm:$0xf]
    %v331 = vld [vmem:[#allocation4 + $0xc] sm:$0xff]
    %v332 = vld [vmem:[#allocation4 + $0x14] sm:$0xf]
    %v333 = vld [vmem:[#allocation4 + $0x18] sm:$0xff]
    %v334 = vld [vmem:[#allocation4 + $0x20] sm:$0xf]
    %v335 = vld [vmem:[#allocation4 + $0x24] sm:$0xff]
    %v336 = vld [vmem:[#allocation4 + $0x2c] sm:$0xf]
    %v337 = vld [vmem:[#allocation4 + $0x30] sm:$0xff]
    %v338 = vld [vmem:[#allocation4 + $0x38] sm:$0xf]
    %v339 = vld [vmem:[#allocation4 + $0x3c] sm:$0xff]
    %v340 = vld [vmem:[#allocation4 + $0x44] sm:$0xf]
    %v341 = vld [vmem:[#allocation4 + $0x48] sm:$0xff]
    %v342 = vld [vmem:[#allocation4 + $0x50] sm:$0xf]
    %v343 = vld [vmem:[#allocation4 + $0x54] sm:$0xff]
    %v344 = vld [vmem:[#allocation4 + $0x5c] sm:$0xf]
    %v345 = vld [vmem:[#allocation4 + $0x60] sm:$0xff]
    %v346 = vld [vmem:[#allocation4 + $0x68] sm:$0xf]
    %v347 = vld [vmem:[#allocation4 + $0x6c] sm:$0xff]
    %v348 = vld [vmem:[#allocation4 + $0x74] sm:$0xf]
    %v349 = vld [vmem:[#allocation4 + $0x78] sm:$0xff]
    %v350 = vld [vmem:[#allocation4 + $0x80] sm:$0xf]
    %v351 = vld [vmem:[#allocation4 + $0x84] sm:$0xff]
    %v352 = vld [vmem:[#allocation4 + $0x8c] sm:$0xf]
    %v353 = vld [vmem:[#allocation4 + $0x90] sm:$0xff]
    %v354 = vld [vmem:[#allocation4 + $0x98] sm:$0xf]
    %v355 = vld [vmem:[#allocation4 + $0x9c] sm:$0xff]
    %v356 = vld [vmem:[#allocation4 + $0xa4] sm:$0xf]
    %v357 = vld [vmem:[#allocation4 + $0xa8] sm:$0xff]
    %v358 = vld [vmem:[#allocation4 + $0xb0] sm:$0xf]
    %v359 = vld [vmem:[#allocation4 + $0xb4] sm:$0xff]
    %v360 = vld [vmem:[#allocation4 + $0xbc] sm:$0xf]
    %v361 = vld [vmem:[#allocation4 + $0xc0] sm:$0xff]
    %v362 = vld [vmem:[#allocation4 + $0xc8] sm:$0xf]
    %v363 = vld [vmem:[#allocation4 + $0xcc] sm:$0xff]
    %v364 = vld [vmem:[#allocation4 + $0xd4] sm:$0xf]
    %v365 = vld [vmem:[#allocation4 + $0xd8] sm:$0xff]
    %v366 = vld [vmem:[#allocation4 + $0xe0] sm:$0xf]
    %v367 = vld [vmem:[#allocation4 + $0xe4] sm:$0xff]
    %v368 = vld [vmem:[#allocation4 + $0xec] sm:$0xf]
    %v369 = vld [vmem:[#allocation4 + $0xf0] sm:$0xff]
    %v370 = vld [vmem:[#allocation4 + $0xf8] sm:$0xf]
    %v371 = vld [vmem:[#allocation4 + $0xfc] sm:$0xff]
    %v372 = vld [vmem:[#allocation4 + $0x104] sm:$0xf]
    %v373 = vld [vmem:[#allocation4 + $0x108] sm:$0xff]
    %v374 = vld [vmem:[#allocation4 + $0x110] sm:$0xf]
    %v375 = vld [vmem:[#allocation4 + $0x114] sm:$0xff]
    %v376 = vld [vmem:[#allocation4 + $0x11c] sm:$0xf]
    %v377 = vld [vmem:[#allocation4 + $0x120] sm:$0xff]
    %v378 = vld [vmem:[#allocation4 + $0x128] sm:$0xf]
    %v379 = vld [vmem:[#allocation4 + $0x12c] sm:$0xff]
    %v380 = vld [vmem:[#allocation4 + $0x134] sm:$0xf]
    %v381 = vld [vmem:[#allocation4 + $0x138] sm:$0xff]
    %v382 = vld [vmem:[#allocation4 + $0x140] sm:$0xf]
    %v383 = vld [vmem:[#allocation4 + $0x144] sm:$0xff]
    %v384 = vld [vmem:[#allocation4 + $0x14c] sm:$0xf]
    %v385 = vld [vmem:[#allocation4 + $0x150] sm:$0xff]
    %v386 = vld [vmem:[#allocation4 + $0x158] sm:$0xf]
    %v387 = vld [vmem:[#allocation4 + $0x15c] sm:$0xff]
    %v388 = vld [vmem:[#allocation4 + $0x164] sm:$0xf]
    %v389 = vld [vmem:[#allocation4 + $0x168] sm:$0xff]
    %v390 = vld [vmem:[#allocation4 + $0x170] sm:$0xf]
    %v391 = vld [vmem:[#allocation4 + $0x174] sm:$0xff]
    %v392 = vld [vmem:[#allocation4 + $0x17c] sm:$0xf]
    %v393 = vld [vmem:[#allocation4 + $0x180] sm:$0xff]
    %v394 = vld [vmem:[#allocation4 + $0x188] sm:$0xf]
    %v395 = vld [vmem:[#allocation4 + $0x18c] sm:$0xff]
    %v396 = vld [vmem:[#allocation4 + $0x194] sm:$0xf]
    %v397 = vld [vmem:[#allocation4 + $0x198] sm:$0xff]
    %v398 = vld [vmem:[#allocation4 + $0x1a0] sm:$0xf]
    %v399 = vld [vmem:[#allocation4 + $0x1a4] sm:$0xff]
    %v400 = vld [vmem:[#allocation4 + $0x1ac] sm:$0xf]
    %v401 = vld [vmem:[#allocation4 + $0x1b0] sm:$0xff]
    %v402 = vld [vmem:[#allocation4 + $0x1b8] sm:$0xf]
    %v403 = vld [vmem:[#allocation4 + $0x1bc] sm:$0xff]
    %v404 = vld [vmem:[#allocation4 + $0x1c4] sm:$0xf]
    %v405 = vld [vmem:[#allocation4 + $0x1c8] sm:$0xff]
    %v406 = vld [vmem:[#allocation4 + $0x1d0] sm:$0xf]
    %v407 = vld [vmem:[#allocation4 + $0x1d4] sm:$0xff]
    %v408 = vld [vmem:[#allocation4 + $0x1dc] sm:$0xf]
    %v409 = vld [vmem:[#allocation4 + $0x1e0] sm:$0xff]
    %v410 = vld [vmem:[#allocation4 + $0x1e8] sm:$0xf]
    %v411 = vld [vmem:[#allocation4 + $0x1ec] sm:$0xff]
    %v412 = vld [vmem:[#allocation4 + $0x1f4] sm:$0xf]
    %v413 = vld [vmem:[#allocation4 + $0x1f8] sm:$0xff]
    %v414 = vld [vmem:[#allocation4 + $0x200] sm:$0xf]
    %v415 = vld [vmem:[#allocation4 + $0x204] sm:$0xff]
    %v416 = vld [vmem:[#allocation4 + $0x20c] sm:$0xf]
    %v417 = vld [vmem:[#allocation4 + $0x210] sm:$0xff]
    %v418 = vld [vmem:[#allocation4 + $0x218] sm:$0xf]
    %v419 = vld [vmem:[#allocation4 + $0x21c] sm:$0xff]
    %v420 = vld [vmem:[#allocation4 + $0x224] sm:$0xf]
    %v421 = vld [vmem:[#allocation4 + $0x228] sm:$0xff]
    %v422 = vld [vmem:[#allocation4 + $0x230] sm:$0xf]
    %v423 = vld [vmem:[#allocation4 + $0x234] sm:$0xff]
    %v424 = vld [vmem:[#allocation4 + $0x23c] sm:$0xf]
    %v425 = vld [vmem:[#allocation4 + $0x240] sm:$0xff]
    %v426 = vld [vmem:[#allocation4 + $0x248] sm:$0xf]
    %v427 = vld [vmem:[#allocation4 + $0x24c] sm:$0xff]
    %v428 = vld [vmem:[#allocation4 + $0x254] sm:$0xf]
    %v429 = vld [vmem:[#allocation4 + $0x258] sm:$0xff]
    %v430 = vld [vmem:[#allocation4 + $0x260] sm:$0xf]
    %v431 = vld [vmem:[#allocation4 + $0x264] sm:$0xff]
    %v432 = vld [vmem:[#allocation4 + $0x26c] sm:$0xf]
    %v433 = vld [vmem:[#allocation4 + $0x270] sm:$0xff]
    %v434 = vld [vmem:[#allocation4 + $0x278] sm:$0xf]
    %v435 = vld [vmem:[#allocation4 + $0x27c] sm:$0xff]
    %v436 = vld [vmem:[#allocation4 + $0x284] sm:$0xf]
    %v437 = vld [vmem:[#allocation4 + $0x288] sm:$0xff]
    %v438 = vld [vmem:[#allocation4 + $0x290] sm:$0xf]
    %v439 = vld [vmem:[#allocation4 + $0x294] sm:$0xff]
    %v440 = vld [vmem:[#allocation4 + $0x29c] sm:$0xf]
    %v441 = vld [vmem:[#allocation4 + $0x2a0] sm:$0xff]
    %v442 = vld [vmem:[#allocation4 + $0x2a8] sm:$0xf]
    %v443 = vld [vmem:[#allocation4 + $0x2ac] sm:$0xff]
    %v444 = vld [vmem:[#allocation4 + $0x2b4] sm:$0xf]
    %v445 = vld [vmem:[#allocation4 + $0x2b8] sm:$0xff]
    %v446 = vld [vmem:[#allocation4 + $0x2c0] sm:$0xf]
    %v447 = vld [vmem:[#allocation4 + $0x2c4] sm:$0xff]
    %v448 = vld [vmem:[#allocation4 + $0x2cc] sm:$0xf]
    %v449 = vld [vmem:[#allocation4 + $0x2d0] sm:$0xff]
    %v450 = vld [vmem:[#allocation4 + $0x2d8] sm:$0xf]
    %v451 = vld [vmem:[#allocation4 + $0x2dc] sm:$0xff]
    %v452 = vld [vmem:[#allocation4 + $0x2e4] sm:$0xf]
    %v453 = vld [vmem:[#allocation4 + $0x2e8] sm:$0xff]
    %v454 = vld [vmem:[#allocation4 + $0x2f0] sm:$0xf]
    %v455 = vld [vmem:[#allocation4 + $0x2f4] sm:$0xff]
    %v456 = vld [vmem:[#allocation4 + $0x2fc] sm:$0xf]
    %v457 = vld [vmem:[%s5] sm:$0x7]
    %v459 = vlaneseq
    %v460 = vshrl.u32 %v459, 7
    %v461 = vsub.s32 0, %v460
    %v462 = vrot.slane %v457, %v461
    %v463 = vlaneseq
    %v464 = vshrl.u32 %v463, 7
    %v465 = vsub.s32 1, %v464
    %v466 = vrot.slane %v457, %v465
    %v467 = vlaneseq
    %v468 = vshrl.u32 %v467, 7
    %v469 = vsub.s32 2, %v468
    %v470 = vrot.slane %v457, %v469
    %v602 = vunpack.c.l.b16 %v329
    %v603 = vunpack.c.h.b16 %v329
    %v604 = vunpack.c.l.b16 %v330
    %v605 = vunpack.c.l.b16 %v331
    %v606 = vunpack.c.h.b16 %v331
    %v607 = vunpack.c.l.b16 %v332
    %v608 = vunpack.c.l.b16 %v333
    %v609 = vunpack.c.h.b16 %v333
    %v610 = vunpack.c.l.b16 %v334
    %v611 = vunpack.c.l.b16 %v335
    %v612 = vunpack.c.h.b16 %v335
    %v613 = vunpack.c.l.b16 %v336
    %v614 = vunpack.c.l.b16 %v337
    %v615 = vunpack.c.h.b16 %v337
    %v616 = vunpack.c.l.b16 %v338
    %v617 = vunpack.c.l.b16 %v339
    %v618 = vunpack.c.h.b16 %v339
    %v619 = vunpack.c.l.b16 %v340
    %v620 = vunpack.c.l.b16 %v341
    %v621 = vunpack.c.h.b16 %v341
    %v622 = vunpack.c.l.b16 %v342
    %v623 = vunpack.c.l.b16 %v343
    %v624 = vunpack.c.h.b16 %v343
    %v625 = vunpack.c.l.b16 %v344
    %v626 = vunpack.c.l.b16 %v345
    %v627 = vunpack.c.h.b16 %v345
    %v628 = vunpack.c.l.b16 %v346
    %v629 = vunpack.c.l.b16 %v347
    %v630 = vunpack.c.h.b16 %v347
    %v631 = vunpack.c.l.b16 %v348
    %v632 = vunpack.c.l.b16 %v349
    %v633 = vunpack.c.h.b16 %v349
    %v634 = vunpack.c.l.b16 %v350
    %v635 = vunpack.c.l.b16 %v351
    %v636 = vunpack.c.h.b16 %v351
    %v637 = vunpack.c.l.b16 %v352
    %v638 = vunpack.c.l.b16 %v353
    %v639 = vunpack.c.h.b16 %v353
    %v640 = vunpack.c.l.b16 %v354
    %v641 = vunpack.c.l.b16 %v355
    %v642 = vunpack.c.h.b16 %v355
    %v643 = vunpack.c.l.b16 %v356
    %v644 = vunpack.c.l.b16 %v357
    %v645 = vunpack.c.h.b16 %v357
    %v646 = vunpack.c.l.b16 %v358
    %v647 = vunpack.c.l.b16 %v359
    %v648 = vunpack.c.h.b16 %v359
    %v649 = vunpack.c.l.b16 %v360
    %v650 = vunpack.c.l.b16 %v361
    %v651 = vunpack.c.h.b16 %v361
    %v652 = vunpack.c.l.b16 %v362
    %v653 = vunpack.c.l.b16 %v363
    %v654 = vunpack.c.h.b16 %v363
    %v655 = vunpack.c.l.b16 %v364
    %v656 = vunpack.c.l.b16 %v365
    %v657 = vunpack.c.h.b16 %v365
    %v658 = vunpack.c.l.b16 %v366
    %v659 = vunpack.c.l.b16 %v367
    %v660 = vunpack.c.h.b16 %v367
    %v661 = vunpack.c.l.b16 %v368
    %v662 = vunpack.c.l.b16 %v369
    %v663 = vunpack.c.h.b16 %v369
    %v664 = vunpack.c.l.b16 %v370
    %v665 = vunpack.c.l.b16 %v371
    %v666 = vunpack.c.h.b16 %v371
    %v667 = vunpack.c.l.b16 %v372
    %v668 = vunpack.c.l.b16 %v373
    %v669 = vunpack.c.h.b16 %v373
    %v670 = vunpack.c.l.b16 %v374
    %v671 = vunpack.c.l.b16 %v375
    %v672 = vunpack.c.h.b16 %v375
    %v673 = vunpack.c.l.b16 %v376
    %v674 = vunpack.c.l.b16 %v377
    %v675 = vunpack.c.h.b16 %v377
    %v676 = vunpack.c.l.b16 %v378
    %v677 = vunpack.c.l.b16 %v379
    %v678 = vunpack.c.h.b16 %v379
    %v679 = vunpack.c.l.b16 %v380
    %v680 = vunpack.c.l.b16 %v381
    %v681 = vunpack.c.h.b16 %v381
    %v682 = vunpack.c.l.b16 %v382
    %v683 = vunpack.c.l.b16 %v383
    %v684 = vunpack.c.h.b16 %v383
    %v685 = vunpack.c.l.b16 %v384
    %v686 = vunpack.c.l.b16 %v385
    %v687 = vunpack.c.h.b16 %v385
    %v688 = vunpack.c.l.b16 %v386
    %v689 = vunpack.c.l.b16 %v387
    %v690 = vunpack.c.h.b16 %v387
    %v691 = vunpack.c.l.b16 %v388
    %v692 = vunpack.c.l.b16 %v389
    %v693 = vunpack.c.h.b16 %v389
    %v694 = vunpack.c.l.b16 %v390
    %v695 = vunpack.c.l.b16 %v391
    %v696 = vunpack.c.h.b16 %v391
    %v697 = vunpack.c.l.b16 %v392
    %v698 = vunpack.c.l.b16 %v393
    %v699 = vunpack.c.h.b16 %v393
    %v700 = vunpack.c.l.b16 %v394
    %v701 = vunpack.c.l.b16 %v395
    %v702 = vunpack.c.h.b16 %v395
    %v703 = vunpack.c.l.b16 %v396
    %v704 = vunpack.c.l.b16 %v397
    %v705 = vunpack.c.h.b16 %v397
    %v706 = vunpack.c.l.b16 %v398
    %v707 = vunpack.c.l.b16 %v399
    %v708 = vunpack.c.h.b16 %v399
    %v709 = vunpack.c.l.b16 %v400
    %v710 = vunpack.c.l.b16 %v401
    %v711 = vunpack.c.h.b16 %v401
    %v712 = vunpack.c.l.b16 %v402
    %v713 = vunpack.c.l.b16 %v403
    %v714 = vunpack.c.h.b16 %v403
    %v715 = vunpack.c.l.b16 %v404
    %v716 = vunpack.c.l.b16 %v405
    %v717 = vunpack.c.h.b16 %v405
    %v718 = vunpack.c.l.b16 %v406
    %v719 = vunpack.c.l.b16 %v407
    %v720 = vunpack.c.h.b16 %v407
    %v721 = vunpack.c.l.b16 %v408
    %v722 = vunpack.c.l.b16 %v409
    %v723 = vunpack.c.h.b16 %v409
    %v724 = vunpack.c.l.b16 %v410
    %v725 = vunpack.c.l.b16 %v411
    %v726 = vunpack.c.h.b16 %v411
    %v727 = vunpack.c.l.b16 %v412
    %v728 = vunpack.c.l.b16 %v413
    %v729 = vunpack.c.h.b16 %v413
    %v730 = vunpack.c.l.b16 %v414
    %v731 = vunpack.c.l.b16 %v415
    %v732 = vunpack.c.h.b16 %v415
    %v733 = vunpack.c.l.b16 %v416
    %v734 = vunpack.c.l.b16 %v417
    %v735 = vunpack.c.h.b16 %v417
    %v736 = vunpack.c.l.b16 %v418
    %v737 = vunpack.c.l.b16 %v419
    %v738 = vunpack.c.h.b16 %v419
    %v739 = vunpack.c.l.b16 %v420
    %v740 = vunpack.c.l.b16 %v421
    %v741 = vunpack.c.h.b16 %v421
    %v742 = vunpack.c.l.b16 %v422
    %v743 = vunpack.c.l.b16 %v423
    %v744 = vunpack.c.h.b16 %v423
    %v745 = vunpack.c.l.b16 %v424
    %v746 = vunpack.c.l.b16 %v425
    %v747 = vunpack.c.h.b16 %v425
    %v748 = vunpack.c.l.b16 %v426
    %v749 = vunpack.c.l.b16 %v427
    %v750 = vunpack.c.h.b16 %v427
    %v751 = vunpack.c.l.b16 %v428
    %v752 = vunpack.c.l.b16 %v429
    %v753 = vunpack.c.h.b16 %v429
    %v754 = vunpack.c.l.b16 %v430
    %v755 = vunpack.c.l.b16 %v431
    %v756 = vunpack.c.h.b16 %v431
    %v757 = vunpack.c.l.b16 %v432
    %v758 = vunpack.c.l.b16 %v433
    %v759 = vunpack.c.h.b16 %v433
    %v760 = vunpack.c.l.b16 %v434
    %v761 = vunpack.c.l.b16 %v435
    %v762 = vunpack.c.h.b16 %v435
    %v763 = vunpack.c.l.b16 %v436
    %v764 = vunpack.c.l.b16 %v437
    %v765 = vunpack.c.h.b16 %v437
    %v766 = vunpack.c.l.b16 %v438
    %v767 = vunpack.c.l.b16 %v439
    %v768 = vunpack.c.h.b16 %v439
    %v769 = vunpack.c.l.b16 %v440
    %v770 = vunpack.c.l.b16 %v441
    %v771 = vunpack.c.h.b16 %v441
    %v772 = vunpack.c.l.b16 %v442
    %v773 = vunpack.c.l.b16 %v443
    %v774 = vunpack.c.h.b16 %v443
    %v775 = vunpack.c.l.b16 %v444
    %v776 = vunpack.c.l.b16 %v445
    %v777 = vunpack.c.h.b16 %v445
    %v778 = vunpack.c.l.b16 %v446
    %v779 = vunpack.c.l.b16 %v447
    %v780 = vunpack.c.h.b16 %v447
    %v781 = vunpack.c.l.b16 %v448
    %v782 = vunpack.c.l.b16 %v449
    %v783 = vunpack.c.h.b16 %v449
    %v784 = vunpack.c.l.b16 %v450
    %v785 = vunpack.c.l.b16 %v451
    %v786 = vunpack.c.h.b16 %v451
    %v787 = vunpack.c.l.b16 %v452
    %v788 = vunpack.c.l.b16 %v453
    %v789 = vunpack.c.h.b16 %v453
    %v790 = vunpack.c.l.b16 %v454
    %v791 = vunpack.c.l.b16 %v455
    %v792 = vunpack.c.h.b16 %v455
    %v793 = vunpack.c.l.b16 %v456
    %v794 = vpack.c.b16 %v605, %v602
    %v795 = vpack.c.b16 %v606, %v603
    %v796 = vpack.c.b16 %v607, %v604
    %v797 = vpack.c.b16 %v611, %v608
    %v798 = vpack.c.b16 %v612, %v609
    %v799 = vpack.c.b16 %v613, %v610
    %v800 = vpack.c.b16 %v617, %v614
    %v801 = vpack.c.b16 %v618, %v615
    %v802 = vpack.c.b16 %v619, %v616
    %v803 = vpack.c.b16 %v623, %v620
    %v804 = vpack.c.b16 %v624, %v621
    %v805 = vpack.c.b16 %v625, %v622
    %v806 = vpack.c.b16 %v629, %v626
    %v807 = vpack.c.b16 %v630, %v627
    %v808 = vpack.c.b16 %v631, %v628
    %v809 = vpack.c.b16 %v635, %v632
    %v810 = vpack.c.b16 %v636, %v633
    %v811 = vpack.c.b16 %v637, %v634
    %v812 = vpack.c.b16 %v641, %v638
    %v813 = vpack.c.b16 %v642, %v639
    %v814 = vpack.c.b16 %v643, %v640
    %v815 = vpack.c.b16 %v647, %v644
    %v816 = vpack.c.b16 %v648, %v645
    %v817 = vpack.c.b16 %v649, %v646
    %v818 = vpack.c.b16 %v653, %v650
    %v819 = vpack.c.b16 %v654, %v651
    %v820 = vpack.c.b16 %v655, %v652
    %v821 = vpack.c.b16 %v659, %v656
    %v822 = vpack.c.b16 %v660, %v657
    %v823 = vpack.c.b16 %v661, %v658
    %v824 = vpack.c.b16 %v665, %v662
    %v825 = vpack.c.b16 %v666, %v663
    %v826 = vpack.c.b16 %v667, %v664
    %v827 = vpack.c.b16 %v671, %v668
    %v828 = vpack.c.b16 %v672, %v669
    %v829 = vpack.c.b16 %v673, %v670
    %v830 = vpack.c.b16 %v677, %v674
    %v831 = vpack.c.b16 %v678, %v675
    %v832 = vpack.c.b16 %v679, %v676
    %v833 = vpack.c.b16 %v683, %v680
    %v834 = vpack.c.b16 %v684, %v681
    %v835 = vpack.c.b16 %v685, %v682
    %v836 = vpack.c.b16 %v689, %v686
    %v837 = vpack.c.b16 %v690, %v687
    %v838 = vpack.c.b16 %v691, %v688
    %v839 = vpack.c.b16 %v695, %v692
    %v840 = vpack.c.b16 %v696, %v693
    %v841 = vpack.c.b16 %v697, %v694
    %v842 = vpack.c.b16 %v701, %v698
    %v843 = vpack.c.b16 %v702, %v699
    %v844 = vpack.c.b16 %v703, %v700
    %v845 = vpack.c.b16 %v707, %v704
    %v846 = vpack.c.b16 %v708, %v705
    %v847 = vpack.c.b16 %v709, %v706
    %v848 = vpack.c.b16 %v713, %v710
    %v849 = vpack.c.b16 %v714, %v711
    %v850 = vpack.c.b16 %v715, %v712
    %v851 = vpack.c.b16 %v719, %v716
    %v852 = vpack.c.b16 %v720, %v717
    %v853 = vpack.c.b16 %v721, %v718
    %v854 = vpack.c.b16 %v725, %v722
    %v855 = vpack.c.b16 %v726, %v723
    %v856 = vpack.c.b16 %v727, %v724
    %v857 = vpack.c.b16 %v731, %v728
    %v858 = vpack.c.b16 %v732, %v729
    %v859 = vpack.c.b16 %v733, %v730
    %v860 = vpack.c.b16 %v737, %v734
    %v861 = vpack.c.b16 %v738, %v735
    %v862 = vpack.c.b16 %v739, %v736
    %v863 = vpack.c.b16 %v743, %v740
    %v864 = vpack.c.b16 %v744, %v741
    %v865 = vpack.c.b16 %v745, %v742
    %v866 = vpack.c.b16 %v749, %v746
    %v867 = vpack.c.b16 %v750, %v747
    %v868 = vpack.c.b16 %v751, %v748
    %v869 = vpack.c.b16 %v755, %v752
    %v870 = vpack.c.b16 %v756, %v753
    %v871 = vpack.c.b16 %v757, %v754
    %v872 = vpack.c.b16 %v761, %v758
    %v873 = vpack.c.b16 %v762, %v759
    %v874 = vpack.c.b16 %v763, %v760
    %v875 = vpack.c.b16 %v767, %v764
    %v876 = vpack.c.b16 %v768, %v765
    %v877 = vpack.c.b16 %v769, %v766
    %v878 = vpack.c.b16 %v773, %v770
    %v879 = vpack.c.b16 %v774, %v771
    %v880 = vpack.c.b16 %v775, %v772
    %v881 = vpack.c.b16 %v779, %v776
    %v882 = vpack.c.b16 %v780, %v777
    %v883 = vpack.c.b16 %v781, %v778
    %v884 = vpack.c.b16 %v785, %v782
    %v885 = vpack.c.b16 %v786, %v783
    %v886 = vpack.c.b16 %v787, %v784
    %v887 = vpack.c.b16 %v791, %v788
    %v888 = vpack.c.b16 %v792, %v789
    %v889 = vpack.c.b16 %v793, %v790
    %986 = vmatprep.subr.bf16.mxu0 %v795
    %987 = vmatpush1.bf16.msra.mxu0 %v794
    %988 = vmatprep.subr.bf16.mxu0 %v798
    %989 = vmatpush1.bf16.msra.mxu0 %v797
    %990 = vmatprep.subr.bf16.mxu0 %v801
    %991 = vmatpush1.bf16.msra.mxu0 %v800
    %992 = vmatprep.subr.bf16.mxu0 %v804
    %993 = vmatpush1.bf16.msra.mxu0 %v803
    %994 = vmatprep.subr.bf16.mxu0 %v807
    %995 = vmatpush1.bf16.msra.mxu0 %v806
    %996 = vmatprep.subr.bf16.mxu0 %v810
    %997 = vmatpush1.bf16.msra.mxu0 %v809
    %998 = vmatprep.subr.bf16.mxu0 %v813
    %999 = vmatpush1.bf16.msra.mxu0 %v812
    %1000 = vmatprep.subr.bf16.mxu0 %v816
    %1001 = vmatpush1.bf16.msra.mxu0 %v815
    %1002 = vmatprep.subr.bf16.mxu0 %v819
    %1003 = vmatpush1.bf16.msra.mxu0 %v818
    %1004 = vmatprep.subr.bf16.mxu0 %v822
    %1005 = vmatpush1.bf16.msra.mxu0 %v821
    %1006 = vmatprep.subr.bf16.mxu0 %v825
    %1007 = vmatpush1.bf16.msra.mxu0 %v824
    %1008 = vmatprep.subr.bf16.mxu0 %v828
    %1009 = vmatpush1.bf16.msra.mxu0 %v827
    %1010 = vmatprep.subr.bf16.mxu0 %v831
    %1011 = vmatpush1.bf16.msra.mxu0 %v830
    %1012 = vmatprep.subr.bf16.mxu0 %v834
    %1013 = vmatpush1.bf16.msra.mxu0 %v833
    %1014 = vmatprep.subr.bf16.mxu0 %v837
    %1015 = vmatpush1.bf16.msra.mxu0 %v836
    %1016 = vmatprep.subr.bf16.mxu0 %v840
    %1017 = vmatpush1.bf16.msra.mxu0 %v839
    %1018 = vmatprep.mubr.bf16.mxu0 %v326
    %1019 = vmatmul.mubr.bf16.gmra.mrb[0].mxu0 %v325
    %v1020 = vpop.f32.mrb[0].mxu0
    %v1021 = vadd.f32 %v462, %v1020
    %v1022 = vpop.f32.mrb[0].mxu0
    %v1023 = vadd.f32 %v466, %v1022
    %v1024 = vpop.f32.mrb[0].mxu0
    %v1025 = vadd.f32 %v462, %v1024
    %v1026 = vpop.f32.mrb[0].mxu0
    %v1027 = vadd.f32 %v466, %v1026
    %1028 = vdwg.mxu0
    %1029 = vmatprep.subr.bf16.mxu0 %v843
    %1030 = vmatpush1.bf16.msra.mxu0 %v842
    %1031 = vmatprep.subr.bf16.mxu0 %v846
    %1032 = vmatpush1.bf16.msra.mxu0 %v845
    %1033 = vmatprep.subr.bf16.mxu0 %v849
    %1034 = vmatpush1.bf16.msra.mxu0 %v848
    %1035 = vmatprep.subr.bf16.mxu0 %v852
    %1036 = vmatpush1.bf16.msra.mxu0 %v851
    %1037 = vmatprep.subr.bf16.mxu0 %v855
    %1038 = vmatpush1.bf16.msra.mxu0 %v854
    %1039 = vmatprep.subr.bf16.mxu0 %v858
    %1040 = vmatpush1.bf16.msra.mxu0 %v857
    %1041 = vmatprep.subr.bf16.mxu0 %v861
    %1042 = vmatpush1.bf16.msra.mxu0 %v860
    %1043 = vmatprep.subr.bf16.mxu0 %v864
    %1044 = vmatpush1.bf16.msra.mxu0 %v863
    %1045 = vmatprep.subr.bf16.mxu0 %v867
    %1046 = vmatpush1.bf16.msra.mxu0 %v866
    %1047 = vmatprep.subr.bf16.mxu0 %v870
    %1048 = vmatpush1.bf16.msra.mxu0 %v869
    %1049 = vmatprep.subr.bf16.mxu0 %v873
    %1050 = vmatpush1.bf16.msra.mxu0 %v872
    %1051 = vmatprep.subr.bf16.mxu0 %v876
    %1052 = vmatpush1.bf16.msra.mxu0 %v875
    %1053 = vmatprep.subr.bf16.mxu0 %v879
    %1054 = vmatpush1.bf16.msra.mxu0 %v878
    %1055 = vmatprep.subr.bf16.mxu0 %v882
    %1056 = vmatpush1.bf16.msra.mxu0 %v881
    %1057 = vmatprep.subr.bf16.mxu0 %v885
    %1058 = vmatpush1.bf16.msra.mxu0 %v884
    %1059 = vmatprep.subr.bf16.mxu0 %v888
    %1060 = vmatpush1.bf16.msra.mxu0 %v887
    %1061 = vmatprep.mubr.bf16.mxu0 %v328
    %1062 = vmatmul.mubr.bf16.gmra.mrb[0].mxu0 %v327
    %v1063 = vpop.f32.mrb[0].mxu0
    %v1064 = vadd.f32 %v1021, %v1063
    %v1065 = vpop.f32.mrb[0].mxu0
    %v1066 = vadd.f32 %v1023, %v1065
    %v1067 = vpop.f32.mrb[0].mxu0
    %v1068 = vadd.f32 %v1025, %v1067
    %v1069 = vpop.f32.mrb[0].mxu0
    %v1070 = vadd.f32 %v1027, %v1069
    %1071 = vdwg.mxu0
    %1072 = vmatprep.subr.bf16.mxu0 0
    %1073 = vmatpush1.bf16.msra.mxu0 %v796
    %1074 = vmatprep.subr.bf16.mxu0 0
    %1075 = vmatpush1.bf16.msra.mxu0 %v799
    %1076 = vmatprep.subr.bf16.mxu0 0
    %1077 = vmatpush1.bf16.msra.mxu0 %v802
    %1078 = vmatprep.subr.bf16.mxu0 0
    %1079 = vmatpush1.bf16.msra.mxu0 %v805
    %1080 = vmatprep.subr.bf16.mxu0 0
    %1081 = vmatpush1.bf16.msra.mxu0 %v808
    %1082 = vmatprep.subr.bf16.mxu0 0
    %1083 = vmatpush1.bf16.msra.mxu0 %v811
    %1084 = vmatprep.subr.bf16.mxu0 0
    %1085 = vmatpush1.bf16.msra.mxu0 %v814
    %1086 = vmatprep.subr.bf16.mxu0 0
    %1087 = vmatpush1.bf16.msra.mxu0 %v817
    %1088 = vmatprep.subr.bf16.mxu0 0
    %1089 = vmatpush1.bf16.msra.mxu0 %v820
    %1090 = vmatprep.subr.bf16.mxu0 0
    %1091 = vmatpush1.bf16.msra.mxu0 %v823
    %1092 = vmatprep.subr.bf16.mxu0 0
    %1093 = vmatpush1.bf16.msra.mxu0 %v826
    %1094 = vmatprep.subr.bf16.mxu0 0
    %1095 = vmatpush1.bf16.msra.mxu0 %v829
    %1096 = vmatprep.subr.bf16.mxu0 0
    %1097 = vmatpush1.bf16.msra.mxu0 %v832
    %1098 = vmatprep.subr.bf16.mxu0 0
    %1099 = vmatpush1.bf16.msra.mxu0 %v835
    %1100 = vmatprep.subr.bf16.mxu0 0
    %1101 = vmatpush1.bf16.msra.mxu0 %v838
    %1102 = vmatprep.subr.bf16.mxu0 0
    %1103 = vmatpush1.bf16.msra.mxu0 %v841
    %1104 = vmatprep.mubr.bf16.mxu0 %v326
    %1105 = vmatmul.mubr.bf16.gmra.mrb[0].mxu0 %v325
    %v1106 = vpop.f32.mrb[0].mxu0
    %v1107 = vadd.f32 %v470, %v1106
    %v1108 = vpop.f32.mrb[0].mxu0
    %v1109 = vpop.f32.mrb[0].mxu0
    %v1110 = vadd.f32 %v470, %v1109
    %v1111 = vpop.f32.mrb[0].mxu0
    %1112 = vdwg.mxu0
    %1113 = vmatprep.subr.bf16.mxu0 0
    %1114 = vmatpush1.bf16.msra.mxu0 %v844
    %1115 = vmatprep.subr.bf16.mxu0 0
    %1116 = vmatpush1.bf16.msra.mxu0 %v847
    %1117 = vmatprep.subr.bf16.mxu0 0
    %1118 = vmatpush1.bf16.msra.mxu0 %v850
    %1119 = vmatprep.subr.bf16.mxu0 0
    %1120 = vmatpush1.bf16.msra.mxu0 %v853
    %1121 = vmatprep.subr.bf16.mxu0 0
    %1122 = vmatpush1.bf16.msra.mxu0 %v856
    %1123 = vmatprep.subr.bf16.mxu0 0
    %1124 = vmatpush1.bf16.msra.mxu0 %v859
    %1125 = vmatprep.subr.bf16.mxu0 0
    %1126 = vmatpush1.bf16.msra.mxu0 %v862
    %1127 = vmatprep.subr.bf16.mxu0 0
    %1128 = vmatpush1.bf16.msra.mxu0 %v865
    %1129 = vmatprep.subr.bf16.mxu0 0
    %1130 = vmatpush1.bf16.msra.mxu0 %v868
    %1131 = vmatprep.subr.bf16.mxu0 0
    %1132 = vmatpush1.bf16.msra.mxu0 %v871
    %1133 = vmatprep.subr.bf16.mxu0 0
    %1134 = vmatpush1.bf16.msra.mxu0 %v874
    %1135 = vmatprep.subr.bf16.mxu0 0
    %1136 = vmatpush1.bf16.msra.mxu0 %v877
    %1137 = vmatprep.subr.bf16.mxu0 0
    %1138 = vmatpush1.bf16.msra.mxu0 %v880
    %1139 = vmatprep.subr.bf16.mxu0 0
    %1140 = vmatpush1.bf16.msra.mxu0 %v883
    %1141 = vmatprep.subr.bf16.mxu0 0
    %1142 = vmatpush1.bf16.msra.mxu0 %v886
    %1143 = vmatprep.subr.bf16.mxu0 0
    %1144 = vmatpush1.bf16.msra.mxu0 %v889
    %1145 = vmatprep.mubr.bf16.mxu0 %v328
    %1146 = vmatmul.mubr.bf16.gmra.mrb[0].mxu0 %v327
    %v1147 = vpop.f32.mrb[0].mxu0
    %v1148 = vadd.f32 %v1107, %v1147
    %v1149 = vpop.f32.mrb[0].mxu0
    %v1150 = vpop.f32.mrb[0].mxu0
    %v1151 = vadd.f32 %v1110, %v1150
    %v1152 = vpop.f32.mrb[0].mxu0
    %1153 = vdwg.mxu0
    %v1154 = vmax.f32 %v1064, 0.0
    %v1155 = vmax.f32 %v1066, 0.0
    %v1156 = vmax.f32 %v1148, 0.0
    %v1157 = vmax.f32 %v1068, 0.0
    %v1158 = vmax.f32 %v1070, 0.0
    %v1159 = vmax.f32 %v1151, 0.0
    %v1160 = vpack.c.bf16 %v1157, %v1154
    %v1161 = vpack.c.bf16 %v1158, %v1155
    %v1162 = vpack.c.bf16 %v1159, %v1156
    %v1163 = vld [vmem:[#allocation6] sm:$0xf]
    %v1164 = vld [vmem:[#allocation6 + $0x4] sm:$0xf]
    %v1165 = vld [vmem:[#allocation6 + $0x8] sm:$0xf]
    %v1166 = vld [vmem:[#allocation6 + $0xc] sm:$0xf]
    %v1167 = vld [vmem:[#allocation6 + $0x10] sm:$0xf]
    %v1168 = vld [vmem:[#allocation6 + $0x14] sm:$0xf]
    %v1169 = vld [vmem:[#allocation6 + $0x18] sm:$0xf]
    %v1170 = vld [vmem:[#allocation6 + $0x1c] sm:$0xf]
    %v1171 = vld [vmem:[#allocation6 + $0x20] sm:$0xf]
    %v1172 = vld [vmem:[#allocation6 + $0x24] sm:$0xf]
    %v1173 = vld [vmem:[#allocation6 + $0x28] sm:$0xf]
    %v1174 = vld [vmem:[#allocation6 + $0x2c] sm:$0xf]
    %v1175 = vld [vmem:[#allocation6 + $0x30] sm:$0xf]
    %v1176 = vld [vmem:[#allocation6 + $0x34] sm:$0xf]
    %v1177 = vld [vmem:[#allocation6 + $0x38] sm:$0xf]
    %v1178 = vld [vmem:[#allocation6 + $0x3c] sm:$0xf]
    %v1179 = vld [vmem:[#allocation6 + $0x40] sm:$0xf]
    %v1180 = vld [vmem:[#allocation6 + $0x44] sm:$0xf]
    %v1181 = vld [vmem:[#allocation6 + $0x48] sm:$0xf]
    %v1182 = vld [vmem:[#allocation6 + $0x4c] sm:$0xf]
    %v1183 = vld [vmem:[#allocation6 + $0x50] sm:$0xf]
    %v1184 = vld [vmem:[#allocation6 + $0x54] sm:$0xf]
    %v1185 = vld [vmem:[#allocation6 + $0x58] sm:$0xf]
    %v1186 = vld [vmem:[#allocation6 + $0x5c] sm:$0xf]
    %v1187 = vld [vmem:[#allocation6 + $0x60] sm:$0xf]
    %v1188 = vld [vmem:[#allocation6 + $0x64] sm:$0xf]
    %v1189 = vld [vmem:[#allocation6 + $0x68] sm:$0xf]
    %v1190 = vld [vmem:[#allocation6 + $0x6c] sm:$0xf]
    %v1191 = vld [vmem:[#allocation6 + $0x70] sm:$0xf]
    %v1192 = vld [vmem:[#allocation6 + $0x74] sm:$0xf]
    %v1193 = vld [vmem:[#allocation6 + $0x78] sm:$0xf]
    %v1194 = vld [vmem:[#allocation6 + $0x7c] sm:$0xf]
    %v1195 = vld [vmem:[#allocation6 + $0x80] sm:$0xf]
    %v1196 = vld [vmem:[#allocation6 + $0x84] sm:$0xf]
    %v1197 = vld [vmem:[#allocation6 + $0x88] sm:$0xf]
    %v1198 = vld [vmem:[#allocation6 + $0x8c] sm:$0xf]
    %v1199 = vld [vmem:[#allocation6 + $0x90] sm:$0xf]
    %v1200 = vld [vmem:[#allocation6 + $0x94] sm:$0xf]
    %v1201 = vld [vmem:[#allocation6 + $0x98] sm:$0xf]
    %v1202 = vld [vmem:[#allocation6 + $0x9c] sm:$0xf]
    %v1203 = vld [vmem:[#allocation6 + $0xa0] sm:$0xf]
    %v1204 = vld [vmem:[#allocation6 + $0xa4] sm:$0xf]
    %v1205 = vld [vmem:[#allocation6 + $0xa8] sm:$0xf]
    %v1206 = vld [vmem:[#allocation6 + $0xac] sm:$0xf]
    %v1207 = vld [vmem:[#allocation6 + $0xb0] sm:$0xf]
    %v1208 = vld [vmem:[#allocation6 + $0xb4] sm:$0xf]
    %v1209 = vld [vmem:[#allocation6 + $0xb8] sm:$0xf]
    %v1210 = vld [vmem:[#allocation6 + $0xbc] sm:$0xf]
    %v1211 = vld [vmem:[%s7] sm:$0x1]
    %v1213 = vlaneseq
    %v1214 = vshrl.u32 %v1213, 7
    %v1215 = vsub.s32 0, %v1214
    %v1216 = vrot.slane %v1211, %v1215
    %v1266 = vunpack.c.l.b16 %v1163
    %v1267 = vunpack.c.l.b16 %v1164
    %v1268 = vunpack.c.l.b16 %v1165
    %v1269 = vunpack.c.l.b16 %v1166
    %v1270 = vunpack.c.l.b16 %v1167
    %v1271 = vunpack.c.l.b16 %v1168
    %v1272 = vunpack.c.l.b16 %v1169
    %v1273 = vunpack.c.l.b16 %v1170
    %v1274 = vunpack.c.l.b16 %v1171
    %v1275 = vunpack.c.l.b16 %v1172
    %v1276 = vunpack.c.l.b16 %v1173
    %v1277 = vunpack.c.l.b16 %v1174
    %v1278 = vunpack.c.l.b16 %v1175
    %v1279 = vunpack.c.l.b16 %v1176
    %v1280 = vunpack.c.l.b16 %v1177
    %v1281 = vunpack.c.l.b16 %v1178
    %v1282 = vunpack.c.l.b16 %v1179
    %v1283 = vunpack.c.l.b16 %v1180
    %v1284 = vunpack.c.l.b16 %v1181
    %v1285 = vunpack.c.l.b16 %v1182
    %v1286 = vunpack.c.l.b16 %v1183
    %v1287 = vunpack.c.l.b16 %v1184
    %v1288 = vunpack.c.l.b16 %v1185
    %v1289 = vunpack.c.l.b16 %v1186
    %v1290 = vunpack.c.l.b16 %v1187
    %v1291 = vunpack.c.l.b16 %v1188
    %v1292 = vunpack.c.l.b16 %v1189
    %v1293 = vunpack.c.l.b16 %v1190
    %v1294 = vunpack.c.l.b16 %v1191
    %v1295 = vunpack.c.l.b16 %v1192
    %v1296 = vunpack.c.l.b16 %v1193
    %v1297 = vunpack.c.l.b16 %v1194
    %v1298 = vunpack.c.l.b16 %v1195
    %v1299 = vunpack.c.l.b16 %v1196
    %v1300 = vunpack.c.l.b16 %v1197
    %v1301 = vunpack.c.l.b16 %v1198
    %v1302 = vunpack.c.l.b16 %v1199
    %v1303 = vunpack.c.l.b16 %v1200
    %v1304 = vunpack.c.l.b16 %v1201
    %v1305 = vunpack.c.l.b16 %v1202
    %v1306 = vunpack.c.l.b16 %v1203
    %v1307 = vunpack.c.l.b16 %v1204
    %v1308 = vunpack.c.l.b16 %v1205
    %v1309 = vunpack.c.l.b16 %v1206
    %v1310 = vunpack.c.l.b16 %v1207
    %v1311 = vunpack.c.l.b16 %v1208
    %v1312 = vunpack.c.l.b16 %v1209
    %v1313 = vunpack.c.l.b16 %v1210
    %v1314 = vpack.c.b16 %v1267, %v1266
    %v1315 = vpack.c.b16 %v1269, %v1268
    %v1316 = vpack.c.b16 %v1271, %v1270
    %v1317 = vpack.c.b16 %v1273, %v1272
    %v1318 = vpack.c.b16 %v1275, %v1274
    %v1319 = vpack.c.b16 %v1277, %v1276
    %v1320 = vpack.c.b16 %v1279, %v1278
    %v1321 = vpack.c.b16 %v1281, %v1280
    %v1322 = vpack.c.b16 %v1283, %v1282
    %v1323 = vpack.c.b16 %v1285, %v1284
    %v1324 = vpack.c.b16 %v1287, %v1286
    %v1325 = vpack.c.b16 %v1289, %v1288
    %v1326 = vpack.c.b16 %v1291, %v1290
    %v1327 = vpack.c.b16 %v1293, %v1292
    %v1328 = vpack.c.b16 %v1295, %v1294
    %v1329 = vpack.c.b16 %v1297, %v1296
    %v1330 = vpack.c.b16 %v1299, %v1298
    %v1331 = vpack.c.b16 %v1301, %v1300
    %v1332 = vpack.c.b16 %v1303, %v1302
    %v1333 = vpack.c.b16 %v1305, %v1304
    %v1334 = vpack.c.b16 %v1307, %v1306
    %v1335 = vpack.c.b16 %v1309, %v1308
    %v1336 = vpack.c.b16 %v1311, %v1310
    %v1337 = vpack.c.b16 %v1313, %v1312
    %1362 = vmatprep.subr.bf16.mxu0 0
    %1363 = vmatpush1.bf16.msra.mxu0 %v1314
    %1364 = vmatprep.subr.bf16.mxu0 0
    %1365 = vmatpush1.bf16.msra.mxu0 %v1315
    %1366 = vmatprep.subr.bf16.mxu0 0
    %1367 = vmatpush1.bf16.msra.mxu0 %v1316
    %1368 = vmatprep.subr.bf16.mxu0 0
    %1369 = vmatpush1.bf16.msra.mxu0 %v1317
    %1370 = vmatprep.subr.bf16.mxu0 0
    %1371 = vmatpush1.bf16.msra.mxu0 %v1318
    %1372 = vmatprep.subr.bf16.mxu0 0
    %1373 = vmatpush1.bf16.msra.mxu0 %v1319
    %1374 = vmatprep.subr.bf16.mxu0 0
    %1375 = vmatpush1.bf16.msra.mxu0 %v1320
    %1376 = vmatprep.subr.bf16.mxu0 0
    %1377 = vmatpush1.bf16.msra.mxu0 %v1321
    %1378 = vmatprep.subr.bf16.mxu0 0
    %1379 = vmatpush1.bf16.msra.mxu0 %v1322
    %1380 = vmatprep.subr.bf16.mxu0 0
    %1381 = vmatpush1.bf16.msra.mxu0 %v1323
    %1382 = vmatprep.subr.bf16.mxu0 0
    %1383 = vmatpush1.bf16.msra.mxu0 %v1324
    %1384 = vmatprep.subr.bf16.mxu0 0
    %1385 = vmatpush1.bf16.msra.mxu0 %v1325
    %1386 = vmatprep.subr.bf16.mxu0 0
    %1387 = vmatpush1.bf16.msra.mxu0 %v1326
    %1388 = vmatprep.subr.bf16.mxu0 0
    %1389 = vmatpush1.bf16.msra.mxu0 %v1327
    %1390 = vmatprep.subr.bf16.mxu0 0
    %1391 = vmatpush1.bf16.msra.mxu0 %v1328
    %1392 = vmatprep.subr.bf16.mxu0 0
    %1393 = vmatpush1.bf16.msra.mxu0 %v1329
    %1394 = vmatprep.mubr.bf16.mxu0 %v1161
    %1395 = vmatmul.mubr.bf16.gmra.mrb[0].mxu0 %v1160
    %v1396 = vpop.f32.mrb[0].mxu0
    %v1397 = vadd.f32 %v1216, %v1396
    %v1398 = vpop.f32.mrb[0].mxu0
    %v1399 = vpop.f32.mrb[0].mxu0
    %v1400 = vadd.f32 %v1216, %v1399
    %v1401 = vpop.f32.mrb[0].mxu0
    %1402 = vdwg.mxu0
    %1403 = vmatprep.subr.bf16.mxu0 0
    %1404 = vmatpush1.bf16.msra.mxu0 %v1330
    %1405 = vmatprep.subr.bf16.mxu0 0
    %1406 = vmatpush1.bf16.msra.mxu0 %v1331
    %1407 = vmatprep.subr.bf16.mxu0 0
    %1408 = vmatpush1.bf16.msra.mxu0 %v1332
    %1409 = vmatprep.subr.bf16.mxu0 0
    %1410 = vmatpush1.bf16.msra.mxu0 %v1333
    %1411 = vmatprep.subr.bf16.mxu0 0
    %1412 = vmatpush1.bf16.msra.mxu0 %v1334
    %1413 = vmatprep.subr.bf16.mxu0 0
    %1414 = vmatpush1.bf16.msra.mxu0 %v1335
    %1415 = vmatprep.subr.bf16.mxu0 0
    %1416 = vmatpush1.bf16.msra.mxu0 %v1336
    %1417 = vmatprep.subr.bf16.mxu0 0
    %1418 = vmatpush1.bf16.msra.mxu0 %v1337
    %1419 = vmatprep.subr.bf16.mxu0 0
    %1420 = vmatpush1.bf16.msra.mxu0 0
    %1421 = vmatprep.subr.bf16.mxu0 0
    %1422 = vmatpush1.bf16.msra.mxu0 0
    %1423 = vmatprep.subr.bf16.mxu0 0
    %1424 = vmatpush1.bf16.msra.mxu0 0
    %1425 = vmatprep.subr.bf16.mxu0 0
    %1426 = vmatpush1.bf16.msra.mxu0 0
    %1427 = vmatprep.subr.bf16.mxu0 0
    %1428 = vmatpush1.bf16.msra.mxu0 0
    %1429 = vmatprep.subr.bf16.mxu0 0
    %1430 = vmatpush1.bf16.msra.mxu0 0
    %1431 = vmatprep.subr.bf16.mxu0 0
    %1432 = vmatpush1.bf16.msra.mxu0 0
    %1433 = vmatprep.subr.bf16.mxu0 0
    %1434 = vmatpush1.bf16.msra.mxu0 0
    %1435 = vmatprep.mubr.bf16.mxu0 0
    %1436 = vmatmul.mubr.bf16.gmra.mrb[0].mxu0 %v1162
    %v1437 = vpop.f32.mrb[0].mxu0
    %v1438 = vadd.f32 %v1397, %v1437
    %v1439 = vpop.f32.mrb[0].mxu0
    %v1440 = vpop.f32.mrb[0].mxu0
    %v1441 = vadd.f32 %v1400, %v1440
    %v1442 = vpop.f32.mrb[0].mxu0
    %1443 = vdwg.mxu0
    %v1444 = vlaneseq
    %v1445 = vand.u32 %v1444, 127
    %vm1446 = vcmp.lt.s32.totalorder %v1445, 3
    %v1447 = vsel %vm1446, %v1438, -1e+30
    %v1448 = vsel %vm1446, %v1441, -1e+30
    %1449 = vmax.xlane.f32.xlu0 %v1447
    %v1450 = vpop.xlane.xlu0 %1449
    %1451 = vmax.xlane.f32.xlu0 %v1448
    %v1452 = vpop.xlane.xlu0 %1451
    %v1453 = vsub.f32 %v1447, %v1450
    %v1454 = vsub.f32 %v1448, %v1452
    %v1455 = vmul.f32 %v1453, 1.442695
    %v1456 = vpow.pop %v1455
    %v1457 = vmul.f32 %v1454, 1.442695
    %v1458 = vpow.pop %v1457
    %1459 = vadd.xlane.f32.xlu0 %v1456
    %v1460 = vpop.xlane.xlu0 %1459
    %1461 = vadd.xlane.f32.xlu0 %v1458
    %v1462 = vpop.xlane.xlu0 %1461
    %v1463 = vrcp.pop %v1460
    %v1464 = vmul.f32 %v1456, %v1463
    %v1465 = vrcp.pop %v1462
    %v1466 = vmul.f32 %v1458, %v1465
    %1467 = vst [vmem:[%s8] sm:$0xff] %v1464
    %s1468 = scalar_lea.vmem %s8, 8
    %1469 = vst [vmem:[%s1468] sm:$0xff] %v1466
    // Predicated region
    $region46: #{option_encode_forward.1} parent=1 // pred_check
      _
    $region47: #{option_encode_forward.1} parent=1 // pred_check_branch
      %1471 = sbr.rel (0) target = $region49
    $region48: #{option_encode_forward.1} parent=1 // pred_region
      _
    $region49: #{option_encode_forward.1} parent=1 // pred_fallthru
      _
    // Predicated region
    $region50: #{option_encode_forward.1} parent=1 // pred_check
      _
    $region51: #{option_encode_forward.1} parent=1 // pred_check_branch
      %1473 = sbr.rel (0) target = $region53
    $region52: #{option_encode_forward.1} parent=1 // pred_region
      _
    $region53: #{option_encode_forward.1} parent=1 // pred_fallthru
      _
    %1474 = vsyncpa [#allocation3], 1
    %1475 = vsyncpa [#allocation5], 1

</llo_original>
